<compile_context>
chip_gen: v7x
topology: tpu7x:2x2x1
jax: 0.10.0
libtpu: 0.0.40
codegen_flags: <defaults>
</compile_context>

<pallas_src>
import functools
import math

import jax
import jax.numpy as jnp
from jax import lax
from jax.experimental import pallas as pl
from jax.experimental.pallas import tpu as pltpu


def _round_up(x, m):
    return ((x + m - 1) // m) * m


def _choose_row_tile(pad_batch):
    # Largest tile in {512, 256, 128} that divides the padded batch and keeps
    # the three (T, Bp) f32 similarity blocks (plus exp temporaries) within a
    # conservative budget (safe even on v7x's 64 MiB physical VMEM).
    budget = 12 * 1024 * 1024
    for t in (512, 256, 128):
        if pad_batch % t == 0 and 3 * t * pad_batch * 4 <= budget:
            return t
    return 128


def _contrastive_loss_kernel(emb_i_ref, emb_j_ref, loss_ref,
                             zi_s_ref, zj_s_ref, colacc_ref, sacc_ref, *,
                             real_batch, pad_batch, row_tile, temperature):
    r = pl.program_id(0)
    num_tiles = pl.num_programs(0)
    inv_t = jnp.float32(1.0 / temperature)
    # Zero-padded rows/columns each contribute exp(0 - 1/t) to the stabilized
    # row/column sums of both blocks they appear in.
    pad_corr = jnp.float32(
        2.0 * (pad_batch - real_batch) * math.exp(-1.0 / temperature))

    @pl.when(r == 0)
    def _init():
        def norm_scale(x):
            x = x.astype(jnp.float32)
            ssq = jnp.sum(x * x, axis=1, keepdims=True)
            # F.normalize(x, dim=1) with eps, fused with the 1/sqrt(t) scale so
            # every dot product below is already cos_sim / temperature.
            return x * (lax.rsqrt(jnp.maximum(ssq, 1e-24))
                        * jnp.float32(1.0 / math.sqrt(temperature)))
        zi_s_ref[...] = norm_scale(emb_i_ref[...]).astype(zi_s_ref.dtype)
        zj_s_ref[...] = norm_scale(emb_j_ref[...]).astype(zj_s_ref.dtype)
        colacc_ref[...] = jnp.zeros_like(colacc_ref)
        sacc_ref[...] = jnp.zeros_like(sacc_ref)
        loss_ref[...] = jnp.zeros_like(loss_ref)

    row0 = pl.multiple_of(r * row_tile, row_tile)
    zi_blk = zi_s_ref[pl.ds(row0, row_tile), :]
    zj_blk = zj_s_ref[pl.ds(row0, row_tile), :]
    zi_all = zi_s_ref[...]
    zj_all = zj_s_ref[...]

    dn = (((1,), (1,)), ((), ()))   # A @ B^T: contract last dims of both (MXU-native)

    # Each (T, Bp) block is reduced right after its exp so only one exp
    # temporary is live at a time.  exp(sim/t - 1/t) is the stabilized scale
    # (never overflows); the +1/t shift is added back analytically at the end.
    s_ii = lax.dot_general(zi_blk, zi_all, dn, preferred_element_type=jnp.float32)
    row_ii = jnp.sum(jnp.exp(s_ii - inv_t), axis=1, keepdims=True)     # (T, 1)

    s_ij = lax.dot_general(zi_blk, zj_all, dn, preferred_element_type=jnp.float32)
    e_ij = jnp.exp(s_ij - inv_t)
    row_ij = jnp.sum(e_ij, axis=1, keepdims=True)                      # (T, 1)
    col_ij = jnp.sum(e_ij, axis=0, keepdims=True)                      # (1, Bp)

    s_jj = lax.dot_general(zj_blk, zj_all, dn, preferred_element_type=jnp.float32)
    col_jj = jnp.sum(jnp.exp(s_jj - inv_t), axis=0, keepdims=True)     # (1, Bp) (= rowsum, symmetric)

    colacc_ref[...] += col_ij + col_jj

    # positives[k] = cos(z_i[k], z_j[k]) / t : a row-wise dot product.
    pos = jnp.sum(zi_blk.astype(jnp.float32) * zj_blk.astype(jnp.float32),
                  axis=1, keepdims=True)                               # (T, 1)

    # Self term is exp(1/t - 1/t) = 1 (||z||^2 == 1 after normalization).
    denom_i = row_ii + row_ij - 1.0 - pad_corr
    if pad_batch != real_batch:
        ridx = row0 + lax.broadcasted_iota(jnp.int32, (row_tile, 1), 0)
        valid = ridx < real_batch
        denom_i = jnp.where(valid, denom_i, 1.0)   # mask before log -> no NaN
        pos = jnp.where(valid, pos, 0.0)
    sacc_ref[...] += jnp.sum(jnp.log(denom_i) - 2.0 * pos)

    @pl.when(r == num_tiles - 1)
    def _finalize():
        denom_j = colacc_ref[...] - 1.0 - pad_corr                     # (1, Bp)
        if pad_batch != real_batch:
            cidx = lax.broadcasted_iota(jnp.int32, (1, pad_batch), 1)
            denom_j = jnp.where(cidx < real_batch, denom_j, 1.0)
        total = sacc_ref[...] + jnp.sum(jnp.log(denom_j))
        # loss = [sum log(denom*e^{-1/t}) - 2*sum pos] / (2B) + 1/t
        loss_ref[...] = total / jnp.float32(2 * real_batch) + inv_t


def contrastive_loss(emb_i, emb_j, temperature=0.5, matmul_dtype=jnp.bfloat16):
    """SimCLR NT-Xent loss.  emb_i, emb_j: (B, D).  Returns scalar float32."""
    assert emb_i.shape == emb_j.shape and emb_i.ndim == 2
    B, D = emb_i.shape
    Bp = _round_up(B, 128)   # lane dim of the similarity blocks -> lane-dense
    Dp = _round_up(D, 128)

    emb_i = emb_i.astype(jnp.float32)
    emb_j = emb_j.astype(jnp.float32)
    if (Bp, Dp) != (B, D):
        pad = ((0, Bp - B), (0, Dp - D))
        emb_i = jnp.pad(emb_i, pad)
        emb_j = jnp.pad(emb_j, pad)

    T = _choose_row_tile(Bp)
    num_tiles = Bp // T

    kernel = functools.partial(
        _contrastive_loss_kernel,
        real_batch=B, pad_batch=Bp, row_tile=T, temperature=float(temperature))

    op_bytes = jnp.dtype(matmul_dtype).itemsize
    cost = pl.CostEstimate(
        flops=6 * Bp * Bp * Dp + 14 * Bp * Dp,      # 3 (T,Bp,Dp) matmuls/tile + elementwise
        transcendentals=3 * Bp * Bp + 6 * Bp,       # 3 exp blocks + rsqrt/log rows
        bytes_accessed=2 * Bp * Dp * 4 + 4)

    # Scoped-VMEM hygiene: defaults are 16 MiB (v5e) / 32 MiB (v6e, v7x);
    # raise only when the resident working set actually needs it.
    vmem_est = (2 * Bp * Dp * 4             # f32 inputs (resident, constant index map)
                + 2 * Bp * Dp * op_bytes    # normalized/scaled operand scratch
                + 6 * T * Bp * 4            # sim block + exp temporary
                + 8 * Bp + 4096)
    vmem_limit = None
    if vmem_est > (12 << 20):
        vmem_limit = min(int(vmem_est * 3 // 2), 100 << 20)

    grid_spec = pltpu.PrefetchScalarGridSpec(
        num_scalar_prefetch=0,
        grid=(num_tiles,),
        in_specs=[pl.BlockSpec((Bp, Dp), lambda r: (0, 0)),
                  pl.BlockSpec((Bp, Dp), lambda r: (0, 0))],
        out_specs=pl.BlockSpec((1, 1), lambda r: (0, 0)),
        scratch_shapes=[pltpu.VMEM((Bp, Dp), matmul_dtype),   # zi_s (normalized * 1/sqrt(t))
                        pltpu.VMEM((Bp, Dp), matmul_dtype),   # zj_s
                        pltpu.VMEM((1, Bp), jnp.float32),     # column-sum accumulator
                        pltpu.VMEM((1, 1), jnp.float32)])     # scalar loss accumulator

    out = pl.pallas_call(
        kernel,
        out_shape=jax.ShapeDtypeStruct((1, 1), jnp.float32),
        grid_spec=grid_spec,
        compiler_params=pltpu.CompilerParams(
            dimension_semantics=("arbitrary",),   # colsum/scalar accumulate across row tiles
            vmem_limit_bytes=vmem_limit),
        cost_estimate=cost,
    )(emb_i, emb_j)
    return out[0, 0]


def _reference_loss(emb_i, emb_j, temperature=0.5):
    # Pure-JAX reference mirroring the PyTorch module.
    def l2norm(x):
        return x / jnp.maximum(jnp.linalg.norm(x, axis=1, keepdims=True), 1e-12)
    zi, zj = l2norm(emb_i), l2norm(emb_j)
    reps = jnp.concatenate([zi, zj], axis=0)
    sim = reps @ reps.T
    B = emb_i.shape[0]
    sim_ij = jnp.diagonal(sim, offset=B)
    sim_ji = jnp.diagonal(sim, offset=-B)
    positives = jnp.concatenate([sim_ij, sim_ji], axis=0)
    nominator = jnp.exp(positives / temperature)
    neg_mask = 1.0 - jnp.eye(2 * B)
    denominator = jnp.sum(neg_mask * jnp.exp(sim / temperature), axis=1)
    return jnp.sum(-jnp.log(nominator / denominator)) / (2 * B)


if __name__ == "__main__":
    # Deterministic "module init": batch_size=4, temperature=0.5.
    batch_size = 4
    hidden = 32
    temperature = 0.5

    key = jax.random.PRNGKey(0)
    k1, k2, k3, k4 = jax.random.split(key, 4)
    emb_i = jax.random.normal(k1, (batch_size, hidden), dtype=jnp.float32)
    emb_j = jax.random.normal(k2, (batch_size, hidden), dtype=jnp.float32)

    ref = _reference_loss(emb_i, emb_j, temperature=temperature)

    # Default (bf16 MXU operands) path: training-loss accuracy.
    loss_bf16 = jax.block_until_ready(
        contrastive_loss(emb_i, emb_j, temperature=temperature))
    assert jnp.allclose(loss_bf16, ref, atol=5e-2, rtol=5e-2), (loss_bf16, ref)

    # Exact f32 operand path: tight check of the algorithm.
    loss_f32 = jax.block_until_ready(
        contrastive_loss(emb_i, emb_j, temperature=temperature,
                         matmul_dtype=jnp.float32))
    assert jnp.allclose(loss_f32, ref, atol=1e-4, rtol=1e-4), (loss_f32, ref)

    # Multi-row-tile path (grid > 1) with batch/feature padding, exact f32.
    eb_i = jax.random.normal(k3, (300, 96), dtype=jnp.float32)
    eb_j = jax.random.normal(k4, (300, 96), dtype=jnp.float32)
    loss_mt = jax.block_until_ready(
        contrastive_loss(eb_i, eb_j, temperature=temperature,
                         matmul_dtype=jnp.float32))
    ref_mt = _reference_loss(eb_i, eb_j, temperature=temperature)
    assert jnp.allclose(loss_mt, ref_mt, atol=1e-4, rtol=1e-4), (loss_mt, ref_mt)

    print("KERNEL_OK")
</pallas_src>

<mosaic_0001>
module attributes {stable_mosaic.version = 11 : i64} {
  func.func @_contrastive_loss_kernel(%arg0: i32, %arg1: memref<128x128xf32, #tpu.memory_space<vmem>>, %arg2: memref<128x128xf32, #tpu.memory_space<vmem>>, %arg3: memref<1x1xf32, #tpu.memory_space<vmem>>, %arg4: memref<128x128xbf16, #tpu.memory_space<vmem>>, %arg5: memref<128x128xbf16, #tpu.memory_space<vmem>>, %arg6: memref<1x128xf32, #tpu.memory_space<vmem>>, %arg7: memref<1x1xf32, #tpu.memory_space<vmem>>) attributes {dimension_semantics = [#tpu.dimension_semantics<arbitrary>], iteration_bounds = array<i64: 1>, scalar_prefetch = 0 : i64, scratch_operands = 4 : i64, tpu.core_type = #tpu.core_type<tc>, window_params = [{pipeline_mode = #tpu.pipeline_mode<synchronous>, transform_indices = @transform_0, window_bounds = array<i64: 128, 128>}, {pipeline_mode = #tpu.pipeline_mode<synchronous>, transform_indices = @transform_1, window_bounds = array<i64: 128, 128>}, {pipeline_mode = #tpu.pipeline_mode<synchronous>, transform_indices = @transform_2, window_bounds = array<i64: 1, 1>}]} {
    %c0_i32 = arith.constant 0 : i32
    %0 = arith.cmpi eq, %arg0, %c0_i32 : i32
    %1 = arith.extui %0 : i1 to i32
    %c0_i32_0 = arith.constant 0 : i32
    %2 = arith.cmpi ne, %1, %c0_i32_0 : i32
    scf.if %2 {
      %c0_34 = arith.constant 0 : index
      %c0_35 = arith.constant 0 : index
      %69 = vector.load %arg1[%c0_34, %c0_35] : memref<128x128xf32, #tpu.memory_space<vmem>>, vector<128x128xf32>
      %70 = arith.mulf %69, %69 : vector<128x128xf32>
      %cst_36 = arith.constant dense<0.000000e+00> : vector<128xf32>
      %71 = vector.multi_reduction <add>, %70, %cst_36 [1] : vector<128x128xf32> to vector<128xf32>
      %72 = vector.shape_cast %71 : vector<128xf32> to vector<128x1xf32>
      %cst_37 = arith.constant 1.000000e-24 : f32
      %73 = vector.broadcast %cst_37 : f32 to vector<128x1xf32>
      %74 = arith.maximumf %72, %73 : vector<128x1xf32>
      %75 = math.rsqrt %74 : vector<128x1xf32>
      %cst_38 = arith.constant 1.41421354 : f32
      %76 = vector.broadcast %cst_38 : f32 to vector<128x1xf32>
      %77 = arith.mulf %75, %76 : vector<128x1xf32>
      %78 = vector.broadcast %77 : vector<128x1xf32> to vector<128x128xf32>
      %79 = arith.mulf %69, %78 : vector<128x128xf32>
      %80 = arith.truncf %79 : vector<128x128xf32> to vector<128x128xbf16>
      %c0_39 = arith.constant 0 : index
      %c0_40 = arith.constant 0 : index
      %81 = vector.load %arg4[%c0_39, %c0_40] : memref<128x128xbf16, #tpu.memory_space<vmem>>, vector<128x128xbf16>
      tpu.vector_store %arg4[%c0_39, %c0_40], %80 {strides = array<i32>} : memref<128x128xbf16, #tpu.memory_space<vmem>>, vector<128x128xbf16>,
      %c0_41 = arith.constant 0 : index
      %c0_42 = arith.constant 0 : index
      %82 = vector.load %arg2[%c0_41, %c0_42] : memref<128x128xf32, #tpu.memory_space<vmem>>, vector<128x128xf32>
      %83 = arith.mulf %82, %82 : vector<128x128xf32>
      %cst_43 = arith.constant dense<0.000000e+00> : vector<128xf32>
      %84 = vector.multi_reduction <add>, %83, %cst_43 [1] : vector<128x128xf32> to vector<128xf32>
      %85 = vector.shape_cast %84 : vector<128xf32> to vector<128x1xf32>
      %cst_44 = arith.constant 1.000000e-24 : f32
      %86 = vector.broadcast %cst_44 : f32 to vector<128x1xf32>
      %87 = arith.maximumf %85, %86 : vector<128x1xf32>
      %88 = math.rsqrt %87 : vector<128x1xf32>
      %cst_45 = arith.constant 1.41421354 : f32
      %89 = vector.broadcast %cst_45 : f32 to vector<128x1xf32>
      %90 = arith.mulf %88, %89 : vector<128x1xf32>
      %91 = vector.broadcast %90 : vector<128x1xf32> to vector<128x128xf32>
      %92 = arith.mulf %82, %91 : vector<128x128xf32>
      %93 = arith.truncf %92 : vector<128x128xf32> to vector<128x128xbf16>
      %c0_46 = arith.constant 0 : index
      %c0_47 = arith.constant 0 : index
      %94 = vector.load %arg5[%c0_46, %c0_47] : memref<128x128xbf16, #tpu.memory_space<vmem>>, vector<128x128xbf16>
      tpu.vector_store %arg5[%c0_46, %c0_47], %93 {strides = array<i32>} : memref<128x128xbf16, #tpu.memory_space<vmem>>, vector<128x128xbf16>,
      %cst_48 = arith.constant 0.000000e+00 : f32
      %95 = vector.broadcast %cst_48 : f32 to vector<1x128xf32>
      %c0_49 = arith.constant 0 : index
      %c0_50 = arith.constant 0 : index
      %96 = vector.load %arg6[%c0_49, %c0_50] : memref<1x128xf32, #tpu.memory_space<vmem>>, vector<1x128xf32>
      tpu.vector_store %arg6[%c0_49, %c0_50], %95 {strides = array<i32>} : memref<1x128xf32, #tpu.memory_space<vmem>>, vector<1x128xf32>,
      %cst_51 = arith.constant 0.000000e+00 : f32
      %97 = vector.broadcast %cst_51 : f32 to vector<1x1xf32>
      %c0_52 = arith.constant 0 : index
      %c0_53 = arith.constant 0 : index
      %98 = vector.load %arg7[%c0_52, %c0_53] : memref<1x1xf32, #tpu.memory_space<vmem>>, vector<1x1xf32>
      tpu.vector_store %arg7[%c0_52, %c0_53], %97 {strides = array<i32>} : memref<1x1xf32, #tpu.memory_space<vmem>>, vector<1x1xf32>,
      %cst_54 = arith.constant 0.000000e+00 : f32
      %99 = vector.broadcast %cst_54 : f32 to vector<1x1xf32>
      %c0_55 = arith.constant 0 : index
      %c0_56 = arith.constant 0 : index
      %100 = vector.load %arg3[%c0_55, %c0_56] : memref<1x1xf32, #tpu.memory_space<vmem>>, vector<1x1xf32>
      tpu.vector_store %arg3[%c0_55, %c0_56], %99 {strides = array<i32>} : memref<1x1xf32, #tpu.memory_space<vmem>>, vector<1x1xf32>,
    } else {
    }
    %c128_i32 = arith.constant 128 : i32
    %3 = arith.muli %arg0, %c128_i32 : i32
    %4 = tpu.assume_multiple %3, 128 : i32
    %5 = arith.index_cast %4 : i32 to index
    %c0 = arith.constant 0 : index
    %6 = vector.load %arg4[%5, %c0] : memref<128x128xbf16, #tpu.memory_space<vmem>>, vector<128x128xbf16>
    %7 = arith.index_cast %4 : i32 to index
    %c0_1 = arith.constant 0 : index
    %8 = vector.load %arg5[%7, %c0_1] : memref<128x128xbf16, #tpu.memory_space<vmem>>, vector<128x128xbf16>
    %c0_2 = arith.constant 0 : index
    %c0_3 = arith.constant 0 : index
    %9 = vector.load %arg4[%c0_2, %c0_3] : memref<128x128xbf16, #tpu.memory_space<vmem>>, vector<128x128xbf16>
    %c0_4 = arith.constant 0 : index
    %c0_5 = arith.constant 0 : index
    %10 = vector.load %arg5[%c0_4, %c0_5] : memref<128x128xbf16, #tpu.memory_space<vmem>>, vector<128x128xbf16>
    %cst = arith.constant dense<0.000000e+00> : vector<128x128xf32>
    %11 = tpu.matmul %6, %9, %cst {dimension_numbers = #tpu.dot_dimension_numbers<[1], [1], [0], [0], [0, 0, 1, 0], [], []>} : vector<128x128xbf16>, vector<128x128xbf16>, vector<128x128xf32> -> vector<128x128xf32>
    %cst_6 = arith.constant 2.000000e+00 : f32
    %12 = vector.broadcast %cst_6 : f32 to vector<128x128xf32>
    %13 = arith.subf %11, %12 : vector<128x128xf32>
    %14 = math.exp %13 : vector<128x128xf32>
    %cst_7 = arith.constant dense<0.000000e+00> : vector<128xf32>
    %15 = vector.multi_reduction <add>, %14, %cst_7 [1] : vector<128x128xf32> to vector<128xf32>
    %16 = vector.shape_cast %15 : vector<128xf32> to vector<128x1xf32>
    %cst_8 = arith.constant dense<0.000000e+00> : vector<128x128xf32>
    %17 = tpu.matmul %6, %10, %cst_8 {dimension_numbers = #tpu.dot_dimension_numbers<[1], [1], [0], [0], [0, 0, 1, 0], [], []>} : vector<128x128xbf16>, vector<128x128xbf16>, vector<128x128xf32> -> vector<128x128xf32>
    %cst_9 = arith.constant 2.000000e+00 : f32
    %18 = vector.broadcast %cst_9 : f32 to vector<128x128xf32>
    %19 = arith.subf %17, %18 : vector<128x128xf32>
    %20 = math.exp %19 : vector<128x128xf32>
    %cst_10 = arith.constant dense<0.000000e+00> : vector<128xf32>
    %21 = vector.multi_reduction <add>, %20, %cst_10 [1] : vector<128x128xf32> to vector<128xf32>
    %22 = vector.shape_cast %21 : vector<128xf32> to vector<128x1xf32>
    %cst_11 = arith.constant dense<0.000000e+00> : vector<128xf32>
    %23 = vector.multi_reduction <add>, %20, %cst_11 [0] : vector<128x128xf32> to vector<128xf32>
    %24 = vector.shape_cast %23 : vector<128xf32> to vector<1x128xf32>
    %cst_12 = arith.constant dense<0.000000e+00> : vector<128x128xf32>
    %25 = tpu.matmul %8, %10, %cst_12 {dimension_numbers = #tpu.dot_dimension_numbers<[1], [1], [0], [0], [0, 0, 1, 0], [], []>} : vector<128x128xbf16>, vector<128x128xbf16>, vector<128x128xf32> -> vector<128x128xf32>
    %cst_13 = arith.constant 2.000000e+00 : f32
    %26 = vector.broadcast %cst_13 : f32 to vector<128x128xf32>
    %27 = arith.subf %25, %26 : vector<128x128xf32>
    %28 = math.exp %27 : vector<128x128xf32>
    %cst_14 = arith.constant dense<0.000000e+00> : vector<128xf32>
    %29 = vector.multi_reduction <add>, %28, %cst_14 [0] : vector<128x128xf32> to vector<128xf32>
    %30 = vector.shape_cast %29 : vector<128xf32> to vector<1x128xf32>
    %c0_15 = arith.constant 0 : index
    %c0_16 = arith.constant 0 : index
    %31 = vector.load %arg6[%c0_15, %c0_16] : memref<1x128xf32, #tpu.memory_space<vmem>>, vector<1x128xf32>
    %32 = arith.addf %24, %30 : vector<1x128xf32>
    %33 = arith.addf %31, %32 : vector<1x128xf32>
    %c0_17 = arith.constant 0 : index
    %c0_18 = arith.constant 0 : index
    %34 = vector.load %arg6[%c0_17, %c0_18] : memref<1x128xf32, #tpu.memory_space<vmem>>, vector<1x128xf32>
    tpu.vector_store %arg6[%c0_17, %c0_18], %33 {strides = array<i32>} : memref<1x128xf32, #tpu.memory_space<vmem>>, vector<1x128xf32>,
    %35 = arith.extf %6 : vector<128x128xbf16> to vector<128x128xf32>
    %36 = arith.extf %8 : vector<128x128xbf16> to vector<128x128xf32>
    %37 = arith.mulf %35, %36 : vector<128x128xf32>
    %cst_19 = arith.constant dense<0.000000e+00> : vector<128xf32>
    %38 = vector.multi_reduction <add>, %37, %cst_19 [1] : vector<128x128xf32> to vector<128xf32>
    %39 = vector.shape_cast %38 : vector<128xf32> to vector<128x1xf32>
    %40 = arith.addf %16, %22 : vector<128x1xf32>
    %cst_20 = arith.constant 1.000000e+00 : f32
    %41 = vector.broadcast %cst_20 : f32 to vector<128x1xf32>
    %42 = arith.subf %40, %41 : vector<128x1xf32>
    %cst_21 = arith.constant 33.5631485 : f32
    %43 = vector.broadcast %cst_21 : f32 to vector<128x1xf32>
    %44 = arith.subf %42, %43 : vector<128x1xf32>
    %45 = tpu.iota {dimensions = array<i32: 0>} : vector<128x1xi32>
    %46 = vector.broadcast %4 : i32 to vector<128x1xi32>
    %47 = arith.addi %46, %45 : vector<128x1xi32>
    %c4_i32 = arith.constant 4 : i32
    %48 = vector.broadcast %c4_i32 : i32 to vector<128x1xi32>
    %49 = arith.cmpi slt, %47, %48 : vector<128x1xi32>
    %cst_22 = arith.constant 1.000000e+00 : f32
    %50 = vector.broadcast %cst_22 : f32 to vector<128x1xf32>
    %51 = arith.select %49, %44, %50 : vector<128x1xi1>, vector<128x1xf32>
    %cst_23 = arith.constant 0.000000e+00 : f32
    %52 = vector.broadcast %cst_23 : f32 to vector<128x1xf32>
    %53 = arith.select %49, %39, %52 : vector<128x1xi1>, vector<128x1xf32>
    %c0_24 = arith.constant 0 : index
    %c0_25 = arith.constant 0 : index
    %54 = vector.load %arg7[%c0_24, %c0_25] : memref<1x1xf32, #tpu.memory_space<vmem>>, vector<1x1xf32>
    %55 = math.log %51 : vector<128x1xf32>
    %cst_26 = arith.constant 2.000000e+00 : f32
    %56 = vector.broadcast %cst_26 : f32 to vector<128x1xf32>
    %57 = arith.mulf %56, %53 : vector<128x1xf32>
    %58 = arith.subf %55, %57 : vector<128x1xf32>
    %59 = vector.shape_cast %58 : vector<128x1xf32> to vector<1x128x1xf32>
    %cst_27 = arith.constant dense<0.000000e+00> : vector<1xf32>
    %60 = vector.multi_reduction <add>, %59, %cst_27 [1, 2] : vector<1x128x1xf32> to vector<1xf32>
    %61 = vector.shape_cast %60 : vector<1xf32> to vector<1x1x1xf32>
    %62 = vector.extract %61[0, 0, 0] : f32 from vector<1x1x1xf32>
    %63 = vector.broadcast %62 : f32 to vector<1x1xf32>
    %64 = arith.addf %54, %63 : vector<1x1xf32>
    %c0_28 = arith.constant 0 : index
    %c0_29 = arith.constant 0 : index
    %65 = vector.load %arg7[%c0_28, %c0_29] : memref<1x1xf32, #tpu.memory_space<vmem>>, vector<1x1xf32>
    tpu.vector_store %arg7[%c0_28, %c0_29], %64 {strides = array<i32>} : memref<1x1xf32, #tpu.memory_space<vmem>>, vector<1x1xf32>,
    %c0_i32_30 = arith.constant 0 : i32
    %66 = arith.cmpi eq, %arg0, %c0_i32_30 : i32
    %67 = arith.extui %66 : i1 to i32
    %cst_31 = arith.constant 33.5631485 : f32
    %cst_32 = arith.constant 2.000000e+00 : f32
    %c0_i32_33 = arith.constant 0 : i32
    %68 = arith.cmpi ne, %67, %c0_i32_33 : i32
    scf.if %68 {
      %c0_34 = arith.constant 0 : index
      %c0_35 = arith.constant 0 : index
      %69 = vector.load %arg6[%c0_34, %c0_35] : memref<1x128xf32, #tpu.memory_space<vmem>>, vector<1x128xf32>
      %cst_36 = arith.constant 1.000000e+00 : f32
      %70 = vector.broadcast %cst_36 : f32 to vector<1x128xf32>
      %71 = arith.subf %69, %70 : vector<1x128xf32>
      %72 = vector.broadcast %cst_31 : f32 to vector<1x128xf32>
      %73 = arith.subf %71, %72 : vector<1x128xf32>
      %74 = tpu.iota {dimensions = array<i32: 1>} : vector<1x128xi32>
      %c4_i32_37 = arith.constant 4 : i32
      %75 = vector.broadcast %c4_i32_37 : i32 to vector<1x128xi32>
      %76 = arith.cmpi slt, %74, %75 : vector<1x128xi32>
      %cst_38 = arith.constant 1.000000e+00 : f32
      %77 = vector.broadcast %cst_38 : f32 to vector<1x128xf32>
      %78 = arith.select %76, %73, %77 : vector<1x128xi1>, vector<1x128xf32>
      %c0_39 = arith.constant 0 : index
      %c0_40 = arith.constant 0 : index
      %79 = vector.load %arg7[%c0_39, %c0_40] : memref<1x1xf32, #tpu.memory_space<vmem>>, vector<1x1xf32>
      %80 = math.log %78 : vector<1x128xf32>
      %81 = vector.shape_cast %80 : vector<1x128xf32> to vector<1x1x128xf32>
      %cst_41 = arith.constant dense<0.000000e+00> : vector<1xf32>
      %82 = vector.multi_reduction <add>, %81, %cst_41 [1, 2] : vector<1x1x128xf32> to vector<1xf32>
      %83 = vector.shape_cast %82 : vector<1xf32> to vector<1x1x1xf32>
      %84 = vector.extract %83[0, 0, 0] : f32 from vector<1x1x1xf32>
      %85 = vector.broadcast %84 : f32 to vector<1x1xf32>
      %86 = arith.addf %79, %85 : vector<1x1xf32>
      %cst_42 = arith.constant 8.000000e+00 : f32
      %87 = vector.broadcast %cst_42 : f32 to vector<1x1xf32>
      %88 = arith.divf %86, %87 : vector<1x1xf32>
      %89 = vector.broadcast %cst_32 : f32 to vector<1x1xf32>
      %90 = arith.addf %88, %89 : vector<1x1xf32>
      %c0_43 = arith.constant 0 : index
      %c0_44 = arith.constant 0 : index
      %91 = vector.load %arg3[%c0_43, %c0_44] : memref<1x1xf32, #tpu.memory_space<vmem>>, vector<1x1xf32>
      tpu.vector_store %arg3[%c0_43, %c0_44], %90 {strides = array<i32>} : memref<1x1xf32, #tpu.memory_space<vmem>>, vector<1x1xf32>,
    } else {
    }
    return
  }
  func.func @transform_0(%arg0: i32) -> (i32, i32) {
    %c0_i32 = arith.constant 0 : i32
    %c0_i32_0 = arith.constant 0 : i32
    %c0_i32_1 = arith.constant 0 : i32
    return %c0_i32, %c0_i32_0 : i32, i32
  }
  func.func @transform_1(%arg0: i32) -> (i32, i32) {
    %c0_i32 = arith.constant 0 : i32
    %c0_i32_0 = arith.constant 0 : i32
    %c0_i32_1 = arith.constant 0 : i32
    return %c0_i32, %c0_i32_0 : i32, i32
  }
  func.func @transform_2(%arg0: i32) -> (i32, i32) {
    %c0_i32 = arith.constant 0 : i32
    %c0_i32_0 = arith.constant 0 : i32
    %c0_i32_1 = arith.constant 0 : i32
    return %c0_i32, %c0_i32_0 : i32, i32
  }
}

</mosaic_0001>

<llo_original>
// kernel: tpu_custom_call.1
$region0: #{tpu_custom_call.1}
  #allocation0 [shape = 'u32[]', space=smem, size = 0x4, offset = 0x4, fixed_abs, tag = 'smem constant byte address 0x4 - core index']
  #allocation1 [shape = 'u32[144,128]{1,0:T(1,128)}', space=vmem, size = 0x12000, scoped, tag = 'internal scratch']
  #allocation2 [shape = 'bf16[128,128]{1,0:T(16,128)(2,1)}', space=vmem, size = 0x8000, scoped, tag = 'scratch operand']
  #allocation3 [shape = 'bf16[128,128]{1,0:T(16,128)(2,1)}', space=vmem, size = 0x8000, scoped, tag = 'scratch operand']
  #allocation4 [shape = 'f32[1,128]{1,0:T(1,128)}', space=vmem, size = 0x200, scoped, tag = 'scratch operand']
  #allocation5 [shape = 'f32[1,1]{1,0:T(1,128)}', space=vmem, size = 0x200, scoped, tag = 'scratch operand']
  %s0 = inlined_call_operand.hbm [shape: f32[128,128], index: 0, kind: input, shape index: {}]
  %s1 = inlined_call_operand.hbm [shape: f32[128,128], index: 1, kind: input, shape index: {}]
  %s2 = inlined_call_operand.hbm [shape: f32[1,1], index: 2, kind: output, shape index: {}]
  %s3 = sld [smem:[#allocation0]]
  $region34: #{tpu_custom_call.1} parent=0
    _
  %s5 = ssub.s32 1, %s3
  %s6 = scalar_select 0, %s5, %s3
  $region1: #{tpu_custom_call.1} parent=0
    #allocation6 [shape = 'u8[65536]{0}', space=vmem, size = 0x10000, scoped, tag = 'input window, operand 0, single buffered']
    #allocation7 [shape = 's32[1]{0}', space=sflag, size = 0x4, scoped, tag = 'scoped memory for tpu_custom_call.1']
    #allocation8 [shape = 's32[1]{0}', space=sflag, size = 0x4, scoped, tag = 'scoped memory for tpu_custom_call.1']
    #allocation9 [shape = 'u8[65536]{0}', space=vmem, size = 0x10000, scoped, tag = 'input window, operand 1, single buffered']
    #allocation10 [shape = 's32[1]{0}', space=sflag, size = 0x4, scoped, tag = 'scoped memory for tpu_custom_call.1']
    #allocation11 [shape = 'u8[512]{0}', space=vmem, size = 0x400, scoped, tag = 'output window, operand 0, single buffered']
    %7 = vsyncpa [#allocation7], 0
    %8 = vsyncpa [#allocation10], 0
    %9 = vsyncpa [#allocation8], 0
    // Predicated region
    $region2: #{tpu_custom_call.1} parent=1 // pred_check
      _
    $region3: #{tpu_custom_call.1} parent=1 // pred_check_branch
      %11 = sbr.rel (0) target = $region5
    $region4: #{tpu_custom_call.1} parent=1 // pred_region
      %s13 = ssub.s32 2048, 2048
      %14 = vsyncadd [#allocation7], %s13
      %s15 = sshll.u32 [#allocation6], 4
      %s16 = int_to_ptr.vmem [resolvable:$true] %s15
      %21 = dma.hbm_to_vmem [thread:$0]  %s0, 2048, %s16, [#allocation7], 128, 128, 8
    $region5: #{tpu_custom_call.1} parent=1 // pred_fallthru
      _
    // Predicated region
    $region6: #{tpu_custom_call.1} parent=1 // pred_check
      _
    $region7: #{tpu_custom_call.1} parent=1 // pred_check_branch
      %23 = sbr.rel (0) target = $region9
    $region8: #{tpu_custom_call.1} parent=1 // pred_region
      %s25 = ssub.s32 2048, 2048
      %26 = vsyncadd [#allocation10], %s25
      %s27 = sshll.u32 [#allocation9], 4
      %s28 = int_to_ptr.vmem [resolvable:$true] %s27
      %33 = dma.hbm_to_vmem [thread:$0]  %s1, 2048, %s28, [#allocation10], 128, 128, 8
    $region9: #{tpu_custom_call.1} parent=1 // pred_fallthru
      _
    // Predicated region
    $region10: #{tpu_custom_call.1} parent=1 // pred_check
      _
    $region11: #{tpu_custom_call.1} parent=1 // pred_check_branch
      %35 = sbr.rel (0) target = $region13
    $region12: #{tpu_custom_call.1} parent=1 // pred_region
      %36 = dma.done [#allocation7], 2048
    $region13: #{tpu_custom_call.1} parent=1 // pred_fallthru
      _
    // Predicated region
    $region14: #{tpu_custom_call.1} parent=1 // pred_check
      _
    $region15: #{tpu_custom_call.1} parent=1 // pred_check_branch
      %38 = sbr.rel (0) target = $region17
    $region16: #{tpu_custom_call.1} parent=1 // pred_region
      %39 = dma.done [#allocation10], 2048
    $region17: #{tpu_custom_call.1} parent=1 // pred_fallthru
      _
    %p41 = scmp.eq.s32.totalorder 0, 0
    // Predicated region
    $region18: #{tpu_custom_call.1} parent=1 // pred_check
      %p42 = pneg %p41
    $region19: #{tpu_custom_call.1} parent=1 // pred_check_branch
      %44 = sbr.rel (%p42) target = $region21
    $region20: #{tpu_custom_call.1} parent=1 // pred_region
      %v45 = vld [vmem:[#allocation6] sm:$0xff]
      %v46 = vld [vmem:[#allocation6 + $0x8] sm:$0xff]
      %v47 = vld [vmem:[#allocation6 + $0x10] sm:$0xff]
      %v48 = vld [vmem:[#allocation6 + $0x18] sm:$0xff]
      %v49 = vld [vmem:[#allocation6 + $0x20] sm:$0xff]
      %v50 = vld [vmem:[#allocation6 + $0x28] sm:$0xff]
      %v51 = vld [vmem:[#allocation6 + $0x30] sm:$0xff]
      %v52 = vld [vmem:[#allocation6 + $0x38] sm:$0xff]
      %v53 = vld [vmem:[#allocation6 + $0x40] sm:$0xff]
      %v54 = vld [vmem:[#allocation6 + $0x48] sm:$0xff]
      %v55 = vld [vmem:[#allocation6 + $0x50] sm:$0xff]
      %v56 = vld [vmem:[#allocation6 + $0x58] sm:$0xff]
      %v57 = vld [vmem:[#allocation6 + $0x60] sm:$0xff]
      %v58 = vld [vmem:[#allocation6 + $0x68] sm:$0xff]
      %v59 = vld [vmem:[#allocation6 + $0x70] sm:$0xff]
      %v60 = vld [vmem:[#allocation6 + $0x78] sm:$0xff]
      %v61 = vmul.f32 %v45, %v45
      %v62 = vmul.f32 %v46, %v46
      %v63 = vmul.f32 %v47, %v47
      %v64 = vmul.f32 %v48, %v48
      %v65 = vmul.f32 %v49, %v49
      %v66 = vmul.f32 %v50, %v50
      %v67 = vmul.f32 %v51, %v51
      %v68 = vmul.f32 %v52, %v52
      %v69 = vmul.f32 %v53, %v53
      %v70 = vmul.f32 %v54, %v54
      %v71 = vmul.f32 %v55, %v55
      %v72 = vmul.f32 %v56, %v56
      %v73 = vmul.f32 %v57, %v57
      %v74 = vmul.f32 %v58, %v58
      %v75 = vmul.f32 %v59, %v59
      %v76 = vmul.f32 %v60, %v60
      %77 = vadd.xlane.f32.xlu0 %v61
      %v78 = vpop.xlane.xlu0 %77
      %79 = vadd.xlane.f32.xlu0 %v62
      %v80 = vpop.xlane.xlu0 %79
      %81 = vadd.xlane.f32.xlu0 %v63
      %v82 = vpop.xlane.xlu0 %81
      %83 = vadd.xlane.f32.xlu0 %v64
      %v84 = vpop.xlane.xlu0 %83
      %85 = vadd.xlane.f32.xlu0 %v65
      %v86 = vpop.xlane.xlu0 %85
      %87 = vadd.xlane.f32.xlu0 %v66
      %v88 = vpop.xlane.xlu0 %87
      %89 = vadd.xlane.f32.xlu0 %v67
      %v90 = vpop.xlane.xlu0 %89
      %91 = vadd.xlane.f32.xlu0 %v68
      %v92 = vpop.xlane.xlu0 %91
      %93 = vadd.xlane.f32.xlu0 %v69
      %v94 = vpop.xlane.xlu0 %93
      %95 = vadd.xlane.f32.xlu0 %v70
      %v96 = vpop.xlane.xlu0 %95
      %97 = vadd.xlane.f32.xlu0 %v71
      %v98 = vpop.xlane.xlu0 %97
      %99 = vadd.xlane.f32.xlu0 %v72
      %v100 = vpop.xlane.xlu0 %99
      %101 = vadd.xlane.f32.xlu0 %v73
      %v102 = vpop.xlane.xlu0 %101
      %103 = vadd.xlane.f32.xlu0 %v74
      %v104 = vpop.xlane.xlu0 %103
      %105 = vadd.xlane.f32.xlu0 %v75
      %v106 = vpop.xlane.xlu0 %105
      %107 = vadd.xlane.f32.xlu0 %v76
      %v108 = vpop.xlane.xlu0 %107
      %v109 = vmax.f32 %v78, 1e-24
      %v110 = vmax.f32 %v80, 1e-24
      %v111 = vmax.f32 %v82, 1e-24
      %v112 = vmax.f32 %v84, 1e-24
      %v113 = vmax.f32 %v86, 1e-24
      %v114 = vmax.f32 %v88, 1e-24
      %v115 = vmax.f32 %v90, 1e-24
      %v116 = vmax.f32 %v92, 1e-24
      %v117 = vmax.f32 %v94, 1e-24
      %v118 = vmax.f32 %v96, 1e-24
      %v119 = vmax.f32 %v98, 1e-24
      %v120 = vmax.f32 %v100, 1e-24
      %v121 = vmax.f32 %v102, 1e-24
      %v122 = vmax.f32 %v104, 1e-24
      %v123 = vmax.f32 %v106, 1e-24
      %v124 = vmax.f32 %v108, 1e-24
      %v125 = vrsqrt.pop %v109
      %v126 = vrsqrt.pop %v110
      %v127 = vrsqrt.pop %v111
      %v128 = vrsqrt.pop %v112
      %v129 = vrsqrt.pop %v113
      %v130 = vrsqrt.pop %v114
      %v131 = vrsqrt.pop %v115
      %v132 = vrsqrt.pop %v116
      %v133 = vrsqrt.pop %v117
      %v134 = vrsqrt.pop %v118
      %v135 = vrsqrt.pop %v119
      %v136 = vrsqrt.pop %v120
      %v137 = vrsqrt.pop %v121
      %v138 = vrsqrt.pop %v122
      %v139 = vrsqrt.pop %v123
      %v140 = vrsqrt.pop %v124
      %v141 = vmul.f32 %v125, 1.4142135
      %v142 = vmul.f32 %v126, 1.4142135
      %v143 = vmul.f32 %v127, 1.4142135
      %v144 = vmul.f32 %v128, 1.4142135
      %v145 = vmul.f32 %v129, 1.4142135
      %v146 = vmul.f32 %v130, 1.4142135
      %v147 = vmul.f32 %v131, 1.4142135
      %v148 = vmul.f32 %v132, 1.4142135
      %v149 = vmul.f32 %v133, 1.4142135
      %v150 = vmul.f32 %v134, 1.4142135
      %v151 = vmul.f32 %v135, 1.4142135
      %v152 = vmul.f32 %v136, 1.4142135
      %v153 = vmul.f32 %v137, 1.4142135
      %v154 = vmul.f32 %v138, 1.4142135
      %v155 = vmul.f32 %v139, 1.4142135
      %v156 = vmul.f32 %v140, 1.4142135
      %v157 = vmul.f32 %v45, %v141
      %v158 = vmul.f32 %v46, %v142
      %v159 = vmul.f32 %v47, %v143
      %v160 = vmul.f32 %v48, %v144
      %v161 = vmul.f32 %v49, %v145
      %v162 = vmul.f32 %v50, %v146
      %v163 = vmul.f32 %v51, %v147
      %v164 = vmul.f32 %v52, %v148
      %v165 = vmul.f32 %v53, %v149
      %v166 = vmul.f32 %v54, %v150
      %v167 = vmul.f32 %v55, %v151
      %v168 = vmul.f32 %v56, %v152
      %v169 = vmul.f32 %v57, %v153
      %v170 = vmul.f32 %v58, %v154
      %v171 = vmul.f32 %v59, %v155
      %v172 = vmul.f32 %v60, %v156
      %v173 = vpack.c.bf16 %v158, %v157
      %v174 = vpack.c.bf16 %v160, %v159
      %v175 = vpack.c.bf16 %v162, %v161
      %v176 = vpack.c.bf16 %v164, %v163
      %v177 = vpack.c.bf16 %v166, %v165
      %v178 = vpack.c.bf16 %v168, %v167
      %v179 = vpack.c.bf16 %v170, %v169
      %v180 = vpack.c.bf16 %v172, %v171
      %181 = vst [vmem:[#allocation2] sm:$0xff] %v173
      %182 = vst [vmem:[#allocation2 + $0x8] sm:$0xff] %v174
      %183 = vst [vmem:[#allocation2 + $0x10] sm:$0xff] %v175
      %184 = vst [vmem:[#allocation2 + $0x18] sm:$0xff] %v176
      %185 = vst [vmem:[#allocation2 + $0x20] sm:$0xff] %v177
      %186 = vst [vmem:[#allocation2 + $0x28] sm:$0xff] %v178
      %187 = vst [vmem:[#allocation2 + $0x30] sm:$0xff] %v179
      %188 = vst [vmem:[#allocation2 + $0x38] sm:$0xff] %v180
      %v189 = vld [vmem:[#allocation9] sm:$0xff]
      %v190 = vld [vmem:[#allocation9 + $0x8] sm:$0xff]
      %v191 = vld [vmem:[#allocation9 + $0x10] sm:$0xff]
      %v192 = vld [vmem:[#allocation9 + $0x18] sm:$0xff]
      %v193 = vld [vmem:[#allocation9 + $0x20] sm:$0xff]
      %v194 = vld [vmem:[#allocation9 + $0x28] sm:$0xff]
      %v195 = vld [vmem:[#allocation9 + $0x30] sm:$0xff]
      %v196 = vld [vmem:[#allocation9 + $0x38] sm:$0xff]
      %v197 = vld [vmem:[#allocation9 + $0x40] sm:$0xff]
      %v198 = vld [vmem:[#allocation9 + $0x48] sm:$0xff]
      %v199 = vld [vmem:[#allocation9 + $0x50] sm:$0xff]
      %v200 = vld [vmem:[#allocation9 + $0x58] sm:$0xff]
      %v201 = vld [vmem:[#allocation9 + $0x60] sm:$0xff]
      %v202 = vld [vmem:[#allocation9 + $0x68] sm:$0xff]
      %v203 = vld [vmem:[#allocation9 + $0x70] sm:$0xff]
      %v204 = vld [vmem:[#allocation9 + $0x78] sm:$0xff]
      %v205 = vmul.f32 %v189, %v189
      %v206 = vmul.f32 %v190, %v190
      %v207 = vmul.f32 %v191, %v191
      %v208 = vmul.f32 %v192, %v192
      %v209 = vmul.f32 %v193, %v193
      %v210 = vmul.f32 %v194, %v194
      %v211 = vmul.f32 %v195, %v195
      %v212 = vmul.f32 %v196, %v196
      %v213 = vmul.f32 %v197, %v197
      %v214 = vmul.f32 %v198, %v198
      %v215 = vmul.f32 %v199, %v199
      %v216 = vmul.f32 %v200, %v200
      %v217 = vmul.f32 %v201, %v201
      %v218 = vmul.f32 %v202, %v202
      %v219 = vmul.f32 %v203, %v203
      %v220 = vmul.f32 %v204, %v204
      %221 = vadd.xlane.f32.xlu0 %v205
      %v222 = vpop.xlane.xlu0 %221
      %223 = vadd.xlane.f32.xlu0 %v206
      %v224 = vpop.xlane.xlu0 %223
      %225 = vadd.xlane.f32.xlu0 %v207
      %v226 = vpop.xlane.xlu0 %225
      %227 = vadd.xlane.f32.xlu0 %v208
      %v228 = vpop.xlane.xlu0 %227
      %229 = vadd.xlane.f32.xlu0 %v209
      %v230 = vpop.xlane.xlu0 %229
      %231 = vadd.xlane.f32.xlu0 %v210
      %v232 = vpop.xlane.xlu0 %231
      %233 = vadd.xlane.f32.xlu0 %v211
      %v234 = vpop.xlane.xlu0 %233
      %235 = vadd.xlane.f32.xlu0 %v212
      %v236 = vpop.xlane.xlu0 %235
      %237 = vadd.xlane.f32.xlu0 %v213
      %v238 = vpop.xlane.xlu0 %237
      %239 = vadd.xlane.f32.xlu0 %v214
      %v240 = vpop.xlane.xlu0 %239
      %241 = vadd.xlane.f32.xlu0 %v215
      %v242 = vpop.xlane.xlu0 %241
      %243 = vadd.xlane.f32.xlu0 %v216
      %v244 = vpop.xlane.xlu0 %243
      %245 = vadd.xlane.f32.xlu0 %v217
      %v246 = vpop.xlane.xlu0 %245
      %247 = vadd.xlane.f32.xlu0 %v218
      %v248 = vpop.xlane.xlu0 %247
      %249 = vadd.xlane.f32.xlu0 %v219
      %v250 = vpop.xlane.xlu0 %249
      %251 = vadd.xlane.f32.xlu0 %v220
      %v252 = vpop.xlane.xlu0 %251
      %v253 = vmax.f32 %v222, 1e-24
      %v254 = vmax.f32 %v224, 1e-24
      %v255 = vmax.f32 %v226, 1e-24
      %v256 = vmax.f32 %v228, 1e-24
      %v257 = vmax.f32 %v230, 1e-24
      %v258 = vmax.f32 %v232, 1e-24
      %v259 = vmax.f32 %v234, 1e-24
      %v260 = vmax.f32 %v236, 1e-24
      %v261 = vmax.f32 %v238, 1e-24
      %v262 = vmax.f32 %v240, 1e-24
      %v263 = vmax.f32 %v242, 1e-24
      %v264 = vmax.f32 %v244, 1e-24
      %v265 = vmax.f32 %v246, 1e-24
      %v266 = vmax.f32 %v248, 1e-24
      %v267 = vmax.f32 %v250, 1e-24
      %v268 = vmax.f32 %v252, 1e-24
      %v269 = vrsqrt.pop %v253
      %v270 = vrsqrt.pop %v254
      %v271 = vrsqrt.pop %v255
      %v272 = vrsqrt.pop %v256
      %v273 = vrsqrt.pop %v257
      %v274 = vrsqrt.pop %v258
      %v275 = vrsqrt.pop %v259
      %v276 = vrsqrt.pop %v260
      %v277 = vrsqrt.pop %v261
      %v278 = vrsqrt.pop %v262
      %v279 = vrsqrt.pop %v263
      %v280 = vrsqrt.pop %v264
      %v281 = vrsqrt.pop %v265
      %v282 = vrsqrt.pop %v266
      %v283 = vrsqrt.pop %v267
      %v284 = vrsqrt.pop %v268
      %v285 = vmul.f32 %v269, 1.4142135
      %v286 = vmul.f32 %v270, 1.4142135
      %v287 = vmul.f32 %v271, 1.4142135
      %v288 = vmul.f32 %v272, 1.4142135
      %v289 = vmul.f32 %v273, 1.4142135
      %v290 = vmul.f32 %v274, 1.4142135
      %v291 = vmul.f32 %v275, 1.4142135
      %v292 = vmul.f32 %v276, 1.4142135
      %v293 = vmul.f32 %v277, 1.4142135
      %v294 = vmul.f32 %v278, 1.4142135
      %v295 = vmul.f32 %v279, 1.4142135
      %v296 = vmul.f32 %v280, 1.4142135
      %v297 = vmul.f32 %v281, 1.4142135
      %v298 = vmul.f32 %v282, 1.4142135
      %v299 = vmul.f32 %v283, 1.4142135
      %v300 = vmul.f32 %v284, 1.4142135
      %v301 = vmul.f32 %v189, %v285
      %v302 = vmul.f32 %v190, %v286
      %v303 = vmul.f32 %v191, %v287
      %v304 = vmul.f32 %v192, %v288
      %v305 = vmul.f32 %v193, %v289
      %v306 = vmul.f32 %v194, %v290
      %v307 = vmul.f32 %v195, %v291
      %v308 = vmul.f32 %v196, %v292
      %v309 = vmul.f32 %v197, %v293
      %v310 = vmul.f32 %v198, %v294
      %v311 = vmul.f32 %v199, %v295
      %v312 = vmul.f32 %v200, %v296
      %v313 = vmul.f32 %v201, %v297
      %v314 = vmul.f32 %v202, %v298
      %v315 = vmul.f32 %v203, %v299
      %v316 = vmul.f32 %v204, %v300
      %v317 = vpack.c.bf16 %v302, %v301
      %v318 = vpack.c.bf16 %v304, %v303
      %v319 = vpack.c.bf16 %v306, %v305
      %v320 = vpack.c.bf16 %v308, %v307
      %v321 = vpack.c.bf16 %v310, %v309
      %v322 = vpack.c.bf16 %v312, %v311
      %v323 = vpack.c.bf16 %v314, %v313
      %v324 = vpack.c.bf16 %v316, %v315
      %325 = vst [vmem:[#allocation3] sm:$0xff] %v317
      %326 = vst [vmem:[#allocation3 + $0x8] sm:$0xff] %v318
      %327 = vst [vmem:[#allocation3 + $0x10] sm:$0xff] %v319
      %328 = vst [vmem:[#allocation3 + $0x18] sm:$0xff] %v320
      %329 = vst [vmem:[#allocation3 + $0x20] sm:$0xff] %v321
      %330 = vst [vmem:[#allocation3 + $0x28] sm:$0xff] %v322
      %331 = vst [vmem:[#allocation3 + $0x30] sm:$0xff] %v323
      %332 = vst [vmem:[#allocation3 + $0x38] sm:$0xff] %v324
      %333 = vst [vmem:[#allocation4] sm:$0x1] 0.0
      %vm334 = vcmask 0
      %335 = vst.msk [vmem:[#allocation5] sm:$0x1] %vm334, 0.0
      %336 = vst.msk [vmem:[#allocation11] sm:$0x1] %vm334, 0.0
    $region21: #{tpu_custom_call.1} parent=1 // pred_fallthru
      _
    %s337 = smul.u32 0, 128
    %s338 = sshra.s32 %s337, 4
    %s339 = sand.u32 %s337, 15
    %s340 = smul.addr %s338, 8
    %s341 = scalar_lea.vmem [#allocation2], %s340
    %v342 = vld [vmem:[%s341] sm:$0xff]
    %v343 = vld [vmem:[%s341 + $0x8] sm:$0xff]
    %v344 = vld [vmem:[%s341 + $0x10] sm:$0xff]
    %v345 = vld [vmem:[%s341 + $0x18] sm:$0xff]
    %v346 = vld [vmem:[%s341 + $0x20] sm:$0xff]
    %v347 = vld [vmem:[%s341 + $0x28] sm:$0xff]
    %v348 = vld [vmem:[%s341 + $0x30] sm:$0xff]
    %v349 = vld [vmem:[%s341 + $0x38] sm:$0xff]
    %s350 = smul.addr %s338, 8
    %s351 = scalar_lea.vmem [#allocation3], %s350
    %v352 = vld [vmem:[%s351] sm:$0xff]
    %v353 = vld [vmem:[%s351 + $0x8] sm:$0xff]
    %v354 = vld [vmem:[%s351 + $0x10] sm:$0xff]
    %v355 = vld [vmem:[%s351 + $0x18] sm:$0xff]
    %v356 = vld [vmem:[%s351 + $0x20] sm:$0xff]
    %v357 = vld [vmem:[%s351 + $0x28] sm:$0xff]
    %v358 = vld [vmem:[%s351 + $0x30] sm:$0xff]
    %v359 = vld [vmem:[%s351 + $0x38] sm:$0xff]
    %v360 = vld [vmem:[#allocation2] sm:$0xff]
    %v361 = vld [vmem:[#allocation2 + $0x8] sm:$0xff]
    %v362 = vld [vmem:[#allocation2 + $0x10] sm:$0xff]
    %v363 = vld [vmem:[#allocation2 + $0x18] sm:$0xff]
    %v364 = vld [vmem:[#allocation2 + $0x20] sm:$0xff]
    %v365 = vld [vmem:[#allocation2 + $0x28] sm:$0xff]
    %v366 = vld [vmem:[#allocation2 + $0x30] sm:$0xff]
    %v367 = vld [vmem:[#allocation2 + $0x38] sm:$0xff]
    %v368 = vld [vmem:[#allocation3] sm:$0xff]
    %v369 = vld [vmem:[#allocation3 + $0x8] sm:$0xff]
    %v370 = vld [vmem:[#allocation3 + $0x10] sm:$0xff]
    %v371 = vld [vmem:[#allocation3 + $0x18] sm:$0xff]
    %v372 = vld [vmem:[#allocation3 + $0x20] sm:$0xff]
    %v373 = vld [vmem:[#allocation3 + $0x28] sm:$0xff]
    %v374 = vld [vmem:[#allocation3 + $0x30] sm:$0xff]
    %v375 = vld [vmem:[#allocation3 + $0x38] sm:$0xff]
    %376 = vmatprep.subr.bf16.mxu0 0
    %377 = vmatpush1.bf16.xpose.msra.mxu0 %v360
    %378 = vmatprep.subr.bf16.mxu0 0
    %379 = vmatpush1.bf16.xpose.msra.mxu0 %v361
    %380 = vmatprep.subr.bf16.mxu0 0
    %381 = vmatpush1.bf16.xpose.msra.mxu0 %v362
    %382 = vmatprep.subr.bf16.mxu0 0
    %383 = vmatpush1.bf16.xpose.msra.mxu0 %v363
    %384 = vmatprep.subr.bf16.mxu0 0
    %385 = vmatpush1.bf16.xpose.msra.mxu0 %v364
    %386 = vmatprep.subr.bf16.mxu0 0
    %387 = vmatpush1.bf16.xpose.msra.mxu0 %v365
    %388 = vmatprep.subr.bf16.mxu0 0
    %389 = vmatpush1.bf16.xpose.msra.mxu0 %v366
    %390 = vmatprep.subr.bf16.mxu0 0
    %391 = vmatpush1.bf16.xpose.msra.mxu0 %v367
    %392 = vmatprep.subr.bf16.mxu0 0
    %393 = vmatpush1.bf16.xpose.msra.mxu0 0
    %394 = vmatprep.subr.bf16.mxu0 0
    %395 = vmatpush1.bf16.xpose.msra.mxu0 0
    %396 = vmatprep.subr.bf16.mxu0 0
    %397 = vmatpush1.bf16.xpose.msra.mxu0 0
    %398 = vmatprep.subr.bf16.mxu0 0
    %399 = vmatpush1.bf16.xpose.msra.mxu0 0
    %400 = vmatprep.subr.bf16.mxu0 0
    %401 = vmatpush1.bf16.xpose.msra.mxu0 0
    %402 = vmatprep.subr.bf16.mxu0 0
    %403 = vmatpush1.bf16.xpose.msra.mxu0 0
    %404 = vmatprep.subr.bf16.mxu0 0
    %405 = vmatpush1.bf16.xpose.msra.mxu0 0
    %406 = vmatprep.subr.bf16.mxu0 0
    %407 = vmatpush1.bf16.xpose.msra.mxu0 0
    %408 = vmatprep.mubr.bf16.mxu0 0
    %409 = vmatmul.mubr.bf16.gmra.mrb[0].mxu0 %v342
    %v410 = vpop.f32.mrb[0].mxu0
    %v411 = vadd.f32 0.0, %v410
    %v412 = vpop.f32.mrb[0].mxu0
    %v413 = vpop.f32.mrb[0].mxu0
    %v414 = vadd.f32 0.0, %v413
    %v415 = vpop.f32.mrb[0].mxu0
    %416 = vmatprep.mubr.bf16.mxu0 0
    %417 = vmatmul.mubr.bf16.gmra.mrb[0].mxu0 %v343
    %v418 = vpop.f32.mrb[0].mxu0
    %v419 = vadd.f32 0.0, %v418
    %v420 = vpop.f32.mrb[0].mxu0
    %v421 = vpop.f32.mrb[0].mxu0
    %v422 = vadd.f32 0.0, %v421
    %v423 = vpop.f32.mrb[0].mxu0
    %424 = vmatprep.mubr.bf16.mxu0 0
    %425 = vmatmul.mubr.bf16.gmra.mrb[0].mxu0 %v344
    %v426 = vpop.f32.mrb[0].mxu0
    %v427 = vadd.f32 0.0, %v426
    %v428 = vpop.f32.mrb[0].mxu0
    %v429 = vpop.f32.mrb[0].mxu0
    %v430 = vadd.f32 0.0, %v429
    %v431 = vpop.f32.mrb[0].mxu0
    %432 = vmatprep.mubr.bf16.mxu0 0
    %433 = vmatmul.mubr.bf16.gmra.mrb[0].mxu0 %v345
    %v434 = vpop.f32.mrb[0].mxu0
    %v435 = vadd.f32 0.0, %v434
    %v436 = vpop.f32.mrb[0].mxu0
    %v437 = vpop.f32.mrb[0].mxu0
    %v438 = vadd.f32 0.0, %v437
    %v439 = vpop.f32.mrb[0].mxu0
    %440 = vmatprep.mubr.bf16.mxu0 0
    %441 = vmatmul.mubr.bf16.gmra.mrb[0].mxu0 %v346
    %v442 = vpop.f32.mrb[0].mxu0
    %v443 = vadd.f32 0.0, %v442
    %v444 = vpop.f32.mrb[0].mxu0
    %v445 = vpop.f32.mrb[0].mxu0
    %v446 = vadd.f32 0.0, %v445
    %v447 = vpop.f32.mrb[0].mxu0
    %448 = vmatprep.mubr.bf16.mxu0 0
    %449 = vmatmul.mubr.bf16.gmra.mrb[0].mxu0 %v347
    %v450 = vpop.f32.mrb[0].mxu0
    %v451 = vadd.f32 0.0, %v450
    %v452 = vpop.f32.mrb[0].mxu0
    %v453 = vpop.f32.mrb[0].mxu0
    %v454 = vadd.f32 0.0, %v453
    %v455 = vpop.f32.mrb[0].mxu0
    %456 = vmatprep.mubr.bf16.mxu0 0
    %457 = vmatmul.mubr.bf16.gmra.mrb[0].mxu0 %v348
    %v458 = vpop.f32.mrb[0].mxu0
    %v459 = vadd.f32 0.0, %v458
    %v460 = vpop.f32.mrb[0].mxu0
    %v461 = vpop.f32.mrb[0].mxu0
    %v462 = vadd.f32 0.0, %v461
    %v463 = vpop.f32.mrb[0].mxu0
    %464 = vmatprep.mubr.bf16.mxu0 0
    %465 = vmatmul.mubr.bf16.gmra.mrb[0].mxu0 %v349
    %v466 = vpop.f32.mrb[0].mxu0
    %v467 = vadd.f32 0.0, %v466
    %v468 = vpop.f32.mrb[0].mxu0
    %v469 = vpop.f32.mrb[0].mxu0
    %v470 = vadd.f32 0.0, %v469
    %v471 = vpop.f32.mrb[0].mxu0
    %472 = vdwg.mxu0
    %v473 = vsub.f32 %v411, 2.0
    %v474 = vsub.f32 %v414, 2.0
    %v475 = vsub.f32 %v419, 2.0
    %v476 = vsub.f32 %v422, 2.0
    %v477 = vsub.f32 %v427, 2.0
    %v478 = vsub.f32 %v430, 2.0
    %v479 = vsub.f32 %v435, 2.0
    %v480 = vsub.f32 %v438, 2.0
    %v481 = vsub.f32 %v443, 2.0
    %v482 = vsub.f32 %v446, 2.0
    %v483 = vsub.f32 %v451, 2.0
    %v484 = vsub.f32 %v454, 2.0
    %v485 = vsub.f32 %v459, 2.0
    %v486 = vsub.f32 %v462, 2.0
    %v487 = vsub.f32 %v467, 2.0
    %v488 = vsub.f32 %v470, 2.0
    %v489 = vmul.f32 %v473, 1.442695
    %v490 = vpow.pop %v489
    %v491 = vmul.f32 %v474, 1.442695
    %v492 = vpow.pop %v491
    %v493 = vmul.f32 %v475, 1.442695
    %v494 = vpow.pop %v493
    %v495 = vmul.f32 %v476, 1.442695
    %v496 = vpow.pop %v495
    %v497 = vmul.f32 %v477, 1.442695
    %v498 = vpow.pop %v497
    %v499 = vmul.f32 %v478, 1.442695
    %v500 = vpow.pop %v499
    %v501 = vmul.f32 %v479, 1.442695
    %v502 = vpow.pop %v501
    %v503 = vmul.f32 %v480, 1.442695
    %v504 = vpow.pop %v503
    %v505 = vmul.f32 %v481, 1.442695
    %v506 = vpow.pop %v505
    %v507 = vmul.f32 %v482, 1.442695
    %v508 = vpow.pop %v507
    %v509 = vmul.f32 %v483, 1.442695
    %v510 = vpow.pop %v509
    %v511 = vmul.f32 %v484, 1.442695
    %v512 = vpow.pop %v511
    %v513 = vmul.f32 %v485, 1.442695
    %v514 = vpow.pop %v513
    %v515 = vmul.f32 %v486, 1.442695
    %v516 = vpow.pop %v515
    %v517 = vmul.f32 %v487, 1.442695
    %v518 = vpow.pop %v517
    %v519 = vmul.f32 %v488, 1.442695
    %v520 = vpow.pop %v519
    %521 = vadd.xlane.f32.xlu0 %v490
    %v522 = vpop.xlane.xlu0 %521
    %523 = vadd.xlane.f32.xlu0 %v492
    %v524 = vpop.xlane.xlu0 %523
    %525 = vadd.xlane.f32.xlu0 %v494
    %v526 = vpop.xlane.xlu0 %525
    %527 = vadd.xlane.f32.xlu0 %v496
    %v528 = vpop.xlane.xlu0 %527
    %529 = vadd.xlane.f32.xlu0 %v498
    %v530 = vpop.xlane.xlu0 %529
    %531 = vadd.xlane.f32.xlu0 %v500
    %v532 = vpop.xlane.xlu0 %531
    %533 = vadd.xlane.f32.xlu0 %v502
    %v534 = vpop.xlane.xlu0 %533
    %535 = vadd.xlane.f32.xlu0 %v504
    %v536 = vpop.xlane.xlu0 %535
    %537 = vadd.xlane.f32.xlu0 %v506
    %v538 = vpop.xlane.xlu0 %537
    %539 = vadd.xlane.f32.xlu0 %v508
    %v540 = vpop.xlane.xlu0 %539
    %541 = vadd.xlane.f32.xlu0 %v510
    %v542 = vpop.xlane.xlu0 %541
    %543 = vadd.xlane.f32.xlu0 %v512
    %v544 = vpop.xlane.xlu0 %543
    %545 = vadd.xlane.f32.xlu0 %v514
    %v546 = vpop.xlane.xlu0 %545
    %547 = vadd.xlane.f32.xlu0 %v516
    %v548 = vpop.xlane.xlu0 %547
    %549 = vadd.xlane.f32.xlu0 %v518
    %v550 = vpop.xlane.xlu0 %549
    %551 = vadd.xlane.f32.xlu0 %v520
    %v552 = vpop.xlane.xlu0 %551
    %553 = vmatprep.subr.bf16.mxu0 0
    %554 = vmatpush1.bf16.xpose.msra.mxu0 %v368
    %555 = vmatprep.subr.bf16.mxu0 0
    %556 = vmatpush1.bf16.xpose.msra.mxu0 %v369
    %557 = vmatprep.subr.bf16.mxu0 0
    %558 = vmatpush1.bf16.xpose.msra.mxu0 %v370
    %559 = vmatprep.subr.bf16.mxu0 0
    %560 = vmatpush1.bf16.xpose.msra.mxu0 %v371
    %561 = vmatprep.subr.bf16.mxu0 0
    %562 = vmatpush1.bf16.xpose.msra.mxu0 %v372
    %563 = vmatprep.subr.bf16.mxu0 0
    %564 = vmatpush1.bf16.xpose.msra.mxu0 %v373
    %565 = vmatprep.subr.bf16.mxu0 0
    %566 = vmatpush1.bf16.xpose.msra.mxu0 %v374
    %567 = vmatprep.subr.bf16.mxu0 0
    %568 = vmatpush1.bf16.xpose.msra.mxu0 %v375
    %569 = vmatprep.subr.bf16.mxu0 0
    %570 = vmatpush1.bf16.xpose.msra.mxu0 0
    %571 = vmatprep.subr.bf16.mxu0 0
    %572 = vmatpush1.bf16.xpose.msra.mxu0 0
    %573 = vmatprep.subr.bf16.mxu0 0
    %574 = vmatpush1.bf16.xpose.msra.mxu0 0
    %575 = vmatprep.subr.bf16.mxu0 0
    %576 = vmatpush1.bf16.xpose.msra.mxu0 0
    %577 = vmatprep.subr.bf16.mxu0 0
    %578 = vmatpush1.bf16.xpose.msra.mxu0 0
    %579 = vmatprep.subr.bf16.mxu0 0
    %580 = vmatpush1.bf16.xpose.msra.mxu0 0
    %581 = vmatprep.subr.bf16.mxu0 0
    %582 = vmatpush1.bf16.xpose.msra.mxu0 0
    %583 = vmatprep.subr.bf16.mxu0 0
    %584 = vmatpush1.bf16.xpose.msra.mxu0 0
    %585 = vmatprep.mubr.bf16.mxu0 0
    %586 = vmatmul.mubr.bf16.gmra.mrb[0].mxu0 %v342
    %v587 = vpop.f32.mrb[0].mxu0
    %v588 = vadd.f32 0.0, %v587
    %v589 = vpop.f32.mrb[0].mxu0
    %v590 = vpop.f32.mrb[0].mxu0
    %v591 = vadd.f32 0.0, %v590
    %v592 = vpop.f32.mrb[0].mxu0
    %593 = vmatprep.mubr.bf16.mxu0 0
    %594 = vmatmul.mubr.bf16.gmra.mrb[0].mxu0 %v343
    %v595 = vpop.f32.mrb[0].mxu0
    %v596 = vadd.f32 0.0, %v595
    %v597 = vpop.f32.mrb[0].mxu0
    %v598 = vpop.f32.mrb[0].mxu0
    %v599 = vadd.f32 0.0, %v598
    %v600 = vpop.f32.mrb[0].mxu0
    %601 = vmatprep.mubr.bf16.mxu0 0
    %602 = vmatmul.mubr.bf16.gmra.mrb[0].mxu0 %v344
    %v603 = vpop.f32.mrb[0].mxu0
    %v604 = vadd.f32 0.0, %v603
    %v605 = vpop.f32.mrb[0].mxu0
    %v606 = vpop.f32.mrb[0].mxu0
    %v607 = vadd.f32 0.0, %v606
    %v608 = vpop.f32.mrb[0].mxu0
    %609 = vmatprep.mubr.bf16.mxu0 0
    %610 = vmatmul.mubr.bf16.gmra.mrb[0].mxu0 %v345
    %v611 = vpop.f32.mrb[0].mxu0
    %v612 = vadd.f32 0.0, %v611
    %v613 = vpop.f32.mrb[0].mxu0
    %v614 = vpop.f32.mrb[0].mxu0
    %v615 = vadd.f32 0.0, %v614
    %v616 = vpop.f32.mrb[0].mxu0
    %617 = vmatprep.mubr.bf16.mxu0 0
    %618 = vmatmul.mubr.bf16.gmra.mrb[0].mxu0 %v346
    %v619 = vpop.f32.mrb[0].mxu0
    %v620 = vadd.f32 0.0, %v619
    %v621 = vpop.f32.mrb[0].mxu0
    %v622 = vpop.f32.mrb[0].mxu0
    %v623 = vadd.f32 0.0, %v622
    %v624 = vpop.f32.mrb[0].mxu0
    %625 = vmatprep.mubr.bf16.mxu0 0
    %626 = vmatmul.mubr.bf16.gmra.mrb[0].mxu0 %v347
    %v627 = vpop.f32.mrb[0].mxu0
    %v628 = vadd.f32 0.0, %v627
    %v629 = vpop.f32.mrb[0].mxu0
    %v630 = vpop.f32.mrb[0].mxu0
    %v631 = vadd.f32 0.0, %v630
    %v632 = vpop.f32.mrb[0].mxu0
    %633 = vmatprep.mubr.bf16.mxu0 0
    %634 = vmatmul.mubr.bf16.gmra.mrb[0].mxu0 %v348
    %v635 = vpop.f32.mrb[0].mxu0
    %v636 = vadd.f32 0.0, %v635
    %v637 = vpop.f32.mrb[0].mxu0
    %v638 = vpop.f32.mrb[0].mxu0
    %v639 = vadd.f32 0.0, %v638
    %v640 = vpop.f32.mrb[0].mxu0
    %641 = vmatprep.mubr.bf16.mxu0 0
    %642 = vmatmul.mubr.bf16.gmra.mrb[0].mxu0 %v349
    %v643 = vpop.f32.mrb[0].mxu0
    %v644 = vadd.f32 0.0, %v643
    %v645 = vpop.f32.mrb[0].mxu0
    %v646 = vpop.f32.mrb[0].mxu0
    %v647 = vadd.f32 0.0, %v646
    %v648 = vpop.f32.mrb[0].mxu0
    %649 = vdwg.mxu0
    %v650 = vsub.f32 %v588, 2.0
    %v651 = vsub.f32 %v591, 2.0
    %v652 = vsub.f32 %v596, 2.0
    %v653 = vsub.f32 %v599, 2.0
    %v654 = vsub.f32 %v604, 2.0
    %v655 = vsub.f32 %v607, 2.0
    %v656 = vsub.f32 %v612, 2.0
    %v657 = vsub.f32 %v615, 2.0
    %v658 = vsub.f32 %v620, 2.0
    %v659 = vsub.f32 %v623, 2.0
    %v660 = vsub.f32 %v628, 2.0
    %v661 = vsub.f32 %v631, 2.0
    %v662 = vsub.f32 %v636, 2.0
    %v663 = vsub.f32 %v639, 2.0
    %v664 = vsub.f32 %v644, 2.0
    %v665 = vsub.f32 %v647, 2.0
    %v666 = vmul.f32 %v650, 1.442695
    %v667 = vpow.pop %v666
    %v668 = vmul.f32 %v651, 1.442695
    %v669 = vpow.pop %v668
    %v670 = vmul.f32 %v652, 1.442695
    %v671 = vpow.pop %v670
    %v672 = vmul.f32 %v653, 1.442695
    %v673 = vpow.pop %v672
    %v674 = vmul.f32 %v654, 1.442695
    %v675 = vpow.pop %v674
    %v676 = vmul.f32 %v655, 1.442695
    %v677 = vpow.pop %v676
    %v678 = vmul.f32 %v656, 1.442695
    %v679 = vpow.pop %v678
    %v680 = vmul.f32 %v657, 1.442695
    %v681 = vpow.pop %v680
    %v682 = vmul.f32 %v658, 1.442695
    %v683 = vpow.pop %v682
    %v684 = vmul.f32 %v659, 1.442695
    %v685 = vpow.pop %v684
    %v686 = vmul.f32 %v660, 1.442695
    %v687 = vpow.pop %v686
    %v688 = vmul.f32 %v661, 1.442695
    %v689 = vpow.pop %v688
    %v690 = vmul.f32 %v662, 1.442695
    %v691 = vpow.pop %v690
    %v692 = vmul.f32 %v663, 1.442695
    %v693 = vpow.pop %v692
    %v694 = vmul.f32 %v664, 1.442695
    %v695 = vpow.pop %v694
    %v696 = vmul.f32 %v665, 1.442695
    %v697 = vpow.pop %v696
    %698 = vadd.xlane.f32.xlu0 %v667
    %v699 = vpop.xlane.xlu0 %698
    %700 = vadd.xlane.f32.xlu0 %v669
    %v701 = vpop.xlane.xlu0 %700
    %702 = vadd.xlane.f32.xlu0 %v671
    %v703 = vpop.xlane.xlu0 %702
    %704 = vadd.xlane.f32.xlu0 %v673
    %v705 = vpop.xlane.xlu0 %704
    %706 = vadd.xlane.f32.xlu0 %v675
    %v707 = vpop.xlane.xlu0 %706
    %708 = vadd.xlane.f32.xlu0 %v677
    %v709 = vpop.xlane.xlu0 %708
    %710 = vadd.xlane.f32.xlu0 %v679
    %v711 = vpop.xlane.xlu0 %710
    %712 = vadd.xlane.f32.xlu0 %v681
    %v713 = vpop.xlane.xlu0 %712
    %714 = vadd.xlane.f32.xlu0 %v683
    %v715 = vpop.xlane.xlu0 %714
    %716 = vadd.xlane.f32.xlu0 %v685
    %v717 = vpop.xlane.xlu0 %716
    %718 = vadd.xlane.f32.xlu0 %v687
    %v719 = vpop.xlane.xlu0 %718
    %720 = vadd.xlane.f32.xlu0 %v689
    %v721 = vpop.xlane.xlu0 %720
    %722 = vadd.xlane.f32.xlu0 %v691
    %v723 = vpop.xlane.xlu0 %722
    %724 = vadd.xlane.f32.xlu0 %v693
    %v725 = vpop.xlane.xlu0 %724
    %726 = vadd.xlane.f32.xlu0 %v695
    %v727 = vpop.xlane.xlu0 %726
    %728 = vadd.xlane.f32.xlu0 %v697
    %v729 = vpop.xlane.xlu0 %728
    %v730 = vadd.f32 %v667, %v669
    %v731 = vadd.f32 %v730, %v671
    %v732 = vadd.f32 %v731, %v673
    %v733 = vadd.f32 %v732, %v675
    %v734 = vadd.f32 %v733, %v677
    %v735 = vadd.f32 %v734, %v679
    %v736 = vadd.f32 %v735, %v681
    %v737 = vadd.f32 %v736, %v683
    %v738 = vadd.f32 %v737, %v685
    %v739 = vadd.f32 %v738, %v687
    %v740 = vadd.f32 %v739, %v689
    %v741 = vadd.f32 %v740, %v691
    %v742 = vadd.f32 %v741, %v693
    %v743 = vadd.f32 %v742, %v695
    %v744 = vadd.f32 %v743, %v697
    %v745 = vrot.slane %v744, 4
    %v746 = vadd.f32 %v744, %v745
    %v747 = vrot.slane %v746, 2
    %v748 = vadd.f32 %v746, %v747
    %v749 = vrot.slane %v748, 1
    %v750 = vadd.f32 %v748, %v749
    %751 = vmatprep.subr.bf16.mxu0 0
    %752 = vmatpush1.bf16.xpose.msra.mxu0 %v368
    %753 = vmatprep.subr.bf16.mxu0 0
    %754 = vmatpush1.bf16.xpose.msra.mxu0 %v369
    %755 = vmatprep.subr.bf16.mxu0 0
    %756 = vmatpush1.bf16.xpose.msra.mxu0 %v370
    %757 = vmatprep.subr.bf16.mxu0 0
    %758 = vmatpush1.bf16.xpose.msra.mxu0 %v371
    %759 = vmatprep.subr.bf16.mxu0 0
    %760 = vmatpush1.bf16.xpose.msra.mxu0 %v372
    %761 = vmatprep.subr.bf16.mxu0 0
    %762 = vmatpush1.bf16.xpose.msra.mxu0 %v373
    %763 = vmatprep.subr.bf16.mxu0 0
    %764 = vmatpush1.bf16.xpose.msra.mxu0 %v374
    %765 = vmatprep.subr.bf16.mxu0 0
    %766 = vmatpush1.bf16.xpose.msra.mxu0 %v375
    %767 = vmatprep.subr.bf16.mxu0 0
    %768 = vmatpush1.bf16.xpose.msra.mxu0 0
    %769 = vmatprep.subr.bf16.mxu0 0
    %770 = vmatpush1.bf16.xpose.msra.mxu0 0
    %771 = vmatprep.subr.bf16.mxu0 0
    %772 = vmatpush1.bf16.xpose.msra.mxu0 0
    %773 = vmatprep.subr.bf16.mxu0 0
    %774 = vmatpush1.bf16.xpose.msra.mxu0 0
    %775 = vmatprep.subr.bf16.mxu0 0
    %776 = vmatpush1.bf16.xpose.msra.mxu0 0
    %777 = vmatprep.subr.bf16.mxu0 0
    %778 = vmatpush1.bf16.xpose.msra.mxu0 0
    %779 = vmatprep.subr.bf16.mxu0 0
    %780 = vmatpush1.bf16.xpose.msra.mxu0 0
    %781 = vmatprep.subr.bf16.mxu0 0
    %782 = vmatpush1.bf16.xpose.msra.mxu0 0
    %783 = vmatprep.mubr.bf16.mxu0 0
    %784 = vmatmul.mubr.bf16.gmra.mrb[0].mxu0 %v352
    %v785 = vpop.f32.mrb[0].mxu0
    %v786 = vadd.f32 0.0, %v785
    %v787 = vpop.f32.mrb[0].mxu0
    %v788 = vpop.f32.mrb[0].mxu0
    %v789 = vadd.f32 0.0, %v788
    %v790 = vpop.f32.mrb[0].mxu0
    %791 = vmatprep.mubr.bf16.mxu0 0
    %792 = vmatmul.mubr.bf16.gmra.mrb[0].mxu0 %v353
    %v793 = vpop.f32.mrb[0].mxu0
    %v794 = vadd.f32 0.0, %v793
    %v795 = vpop.f32.mrb[0].mxu0
    %v796 = vpop.f32.mrb[0].mxu0
    %v797 = vadd.f32 0.0, %v796
    %v798 = vpop.f32.mrb[0].mxu0
    %799 = vmatprep.mubr.bf16.mxu0 0
    %800 = vmatmul.mubr.bf16.gmra.mrb[0].mxu0 %v354
    %v801 = vpop.f32.mrb[0].mxu0
    %v802 = vadd.f32 0.0, %v801
    %v803 = vpop.f32.mrb[0].mxu0
    %v804 = vpop.f32.mrb[0].mxu0
    %v805 = vadd.f32 0.0, %v804
    %v806 = vpop.f32.mrb[0].mxu0
    %807 = vmatprep.mubr.bf16.mxu0 0
    %808 = vmatmul.mubr.bf16.gmra.mrb[0].mxu0 %v355
    %v809 = vpop.f32.mrb[0].mxu0
    %v810 = vadd.f32 0.0, %v809
    %v811 = vpop.f32.mrb[0].mxu0
    %v812 = vpop.f32.mrb[0].mxu0
    %v813 = vadd.f32 0.0, %v812
    %v814 = vpop.f32.mrb[0].mxu0
    %815 = vmatprep.mubr.bf16.mxu0 0
    %816 = vmatmul.mubr.bf16.gmra.mrb[0].mxu0 %v356
    %v817 = vpop.f32.mrb[0].mxu0
    %v818 = vadd.f32 0.0, %v817
    %v819 = vpop.f32.mrb[0].mxu0
    %v820 = vpop.f32.mrb[0].mxu0
    %v821 = vadd.f32 0.0, %v820
    %v822 = vpop.f32.mrb[0].mxu0
    %823 = vmatprep.mubr.bf16.mxu0 0
    %824 = vmatmul.mubr.bf16.gmra.mrb[0].mxu0 %v357
    %v825 = vpop.f32.mrb[0].mxu0
    %v826 = vadd.f32 0.0, %v825
    %v827 = vpop.f32.mrb[0].mxu0
    %v828 = vpop.f32.mrb[0].mxu0
    %v829 = vadd.f32 0.0, %v828
    %v830 = vpop.f32.mrb[0].mxu0
    %831 = vmatprep.mubr.bf16.mxu0 0
    %832 = vmatmul.mubr.bf16.gmra.mrb[0].mxu0 %v358
    %v833 = vpop.f32.mrb[0].mxu0
    %v834 = vadd.f32 0.0, %v833
    %v835 = vpop.f32.mrb[0].mxu0
    %v836 = vpop.f32.mrb[0].mxu0
    %v837 = vadd.f32 0.0, %v836
    %v838 = vpop.f32.mrb[0].mxu0
    %839 = vmatprep.mubr.bf16.mxu0 0
    %840 = vmatmul.mubr.bf16.gmra.mrb[0].mxu0 %v359
    %v841 = vpop.f32.mrb[0].mxu0
    %v842 = vadd.f32 0.0, %v841
    %v843 = vpop.f32.mrb[0].mxu0
    %v844 = vpop.f32.mrb[0].mxu0
    %v845 = vadd.f32 0.0, %v844
    %v846 = vpop.f32.mrb[0].mxu0
    %847 = vdwg.mxu0
    %v848 = vsub.f32 %v786, 2.0
    %v849 = vsub.f32 %v789, 2.0
    %v850 = vsub.f32 %v794, 2.0
    %v851 = vsub.f32 %v797, 2.0
    %v852 = vsub.f32 %v802, 2.0
    %v853 = vsub.f32 %v805, 2.0
    %v854 = vsub.f32 %v810, 2.0
    %v855 = vsub.f32 %v813, 2.0
    %v856 = vsub.f32 %v818, 2.0
    %v857 = vsub.f32 %v821, 2.0
    %v858 = vsub.f32 %v826, 2.0
    %v859 = vsub.f32 %v829, 2.0
    %v860 = vsub.f32 %v834, 2.0
    %v861 = vsub.f32 %v837, 2.0
    %v862 = vsub.f32 %v842, 2.0
    %v863 = vsub.f32 %v845, 2.0
    %v864 = vmul.f32 %v848, 1.442695
    %v865 = vpow.pop %v864
    %v866 = vmul.f32 %v849, 1.442695
    %v867 = vpow.pop %v866
    %v868 = vmul.f32 %v850, 1.442695
    %v869 = vpow.pop %v868
    %v870 = vmul.f32 %v851, 1.442695
    %v871 = vpow.pop %v870
    %v872 = vmul.f32 %v852, 1.442695
    %v873 = vpow.pop %v872
    %v874 = vmul.f32 %v853, 1.442695
    %v875 = vpow.pop %v874
    %v876 = vmul.f32 %v854, 1.442695
    %v877 = vpow.pop %v876
    %v878 = vmul.f32 %v855, 1.442695
    %v879 = vpow.pop %v878
    %v880 = vmul.f32 %v856, 1.442695
    %v881 = vpow.pop %v880
    %v882 = vmul.f32 %v857, 1.442695
    %v883 = vpow.pop %v882
    %v884 = vmul.f32 %v858, 1.442695
    %v885 = vpow.pop %v884
    %v886 = vmul.f32 %v859, 1.442695
    %v887 = vpow.pop %v886
    %v888 = vmul.f32 %v860, 1.442695
    %v889 = vpow.pop %v888
    %v890 = vmul.f32 %v861, 1.442695
    %v891 = vpow.pop %v890
    %v892 = vmul.f32 %v862, 1.442695
    %v893 = vpow.pop %v892
    %v894 = vmul.f32 %v863, 1.442695
    %v895 = vpow.pop %v894
    %v896 = vadd.f32 %v865, %v867
    %v897 = vadd.f32 %v896, %v869
    %v898 = vadd.f32 %v897, %v871
    %v899 = vadd.f32 %v898, %v873
    %v900 = vadd.f32 %v899, %v875
    %v901 = vadd.f32 %v900, %v877
    %v902 = vadd.f32 %v901, %v879
    %v903 = vadd.f32 %v902, %v881
    %v904 = vadd.f32 %v903, %v883
    %v905 = vadd.f32 %v904, %v885
    %v906 = vadd.f32 %v905, %v887
    %v907 = vadd.f32 %v906, %v889
    %v908 = vadd.f32 %v907, %v891
    %v909 = vadd.f32 %v908, %v893
    %v910 = vadd.f32 %v909, %v895
    %v911 = vrot.slane %v910, 4
    %v912 = vadd.f32 %v910, %v911
    %v913 = vrot.slane %v912, 2
    %v914 = vadd.f32 %v912, %v913
    %v915 = vrot.slane %v914, 1
    %v916 = vadd.f32 %v914, %v915
    %v917 = vld [vmem:[#allocation4] sm:$0x1]
    %v918 = vadd.f32 %v750, %v916
    %v919 = vadd.f32 %v917, %v918
    %920 = vst [vmem:[#allocation4] sm:$0x1] %v919
    %v921 = vunpack.c.l.bf16 %v342
    %v922 = vunpack.c.h.bf16 %v342
    %v923 = vunpack.c.l.bf16 %v343
    %v924 = vunpack.c.h.bf16 %v343
    %v925 = vunpack.c.l.bf16 %v344
    %v926 = vunpack.c.h.bf16 %v344
    %v927 = vunpack.c.l.bf16 %v345
    %v928 = vunpack.c.h.bf16 %v345
    %v929 = vunpack.c.l.bf16 %v346
    %v930 = vunpack.c.h.bf16 %v346
    %v931 = vunpack.c.l.bf16 %v347
    %v932 = vunpack.c.h.bf16 %v347
    %v933 = vunpack.c.l.bf16 %v348
    %v934 = vunpack.c.h.bf16 %v348
    %v935 = vunpack.c.l.bf16 %v349
    %v936 = vunpack.c.h.bf16 %v349
    %v937 = vunpack.c.l.bf16 %v352
    %v938 = vunpack.c.h.bf16 %v352
    %v939 = vunpack.c.l.bf16 %v353
    %v940 = vunpack.c.h.bf16 %v353
    %v941 = vunpack.c.l.bf16 %v354
    %v942 = vunpack.c.h.bf16 %v354
    %v943 = vunpack.c.l.bf16 %v355
    %v944 = vunpack.c.h.bf16 %v355
    %v945 = vunpack.c.l.bf16 %v356
    %v946 = vunpack.c.h.bf16 %v356
    %v947 = vunpack.c.l.bf16 %v357
    %v948 = vunpack.c.h.bf16 %v357
    %v949 = vunpack.c.l.bf16 %v358
    %v950 = vunpack.c.h.bf16 %v358
    %v951 = vunpack.c.l.bf16 %v359
    %v952 = vunpack.c.h.bf16 %v359
    %v953 = vmul.f32 %v921, %v937
    %v954 = vmul.f32 %v922, %v938
    %v955 = vmul.f32 %v923, %v939
    %v956 = vmul.f32 %v924, %v940
    %v957 = vmul.f32 %v925, %v941
    %v958 = vmul.f32 %v926, %v942
    %v959 = vmul.f32 %v927, %v943
    %v960 = vmul.f32 %v928, %v944
    %v961 = vmul.f32 %v929, %v945
    %v962 = vmul.f32 %v930, %v946
    %v963 = vmul.f32 %v931, %v947
    %v964 = vmul.f32 %v932, %v948
    %v965 = vmul.f32 %v933, %v949
    %v966 = vmul.f32 %v934, %v950
    %v967 = vmul.f32 %v935, %v951
    %v968 = vmul.f32 %v936, %v952
    %969 = vadd.xlane.f32.xlu0 %v953
    %v970 = vpop.xlane.xlu0 %969
    %971 = vadd.xlane.f32.xlu0 %v954
    %v972 = vpop.xlane.xlu0 %971
    %973 = vadd.xlane.f32.xlu0 %v955
    %v974 = vpop.xlane.xlu0 %973
    %975 = vadd.xlane.f32.xlu0 %v956
    %v976 = vpop.xlane.xlu0 %975
    %977 = vadd.xlane.f32.xlu0 %v957
    %v978 = vpop.xlane.xlu0 %977
    %979 = vadd.xlane.f32.xlu0 %v958
    %v980 = vpop.xlane.xlu0 %979
    %981 = vadd.xlane.f32.xlu0 %v959
    %v982 = vpop.xlane.xlu0 %981
    %983 = vadd.xlane.f32.xlu0 %v960
    %v984 = vpop.xlane.xlu0 %983
    %985 = vadd.xlane.f32.xlu0 %v961
    %v986 = vpop.xlane.xlu0 %985
    %987 = vadd.xlane.f32.xlu0 %v962
    %v988 = vpop.xlane.xlu0 %987
    %989 = vadd.xlane.f32.xlu0 %v963
    %v990 = vpop.xlane.xlu0 %989
    %991 = vadd.xlane.f32.xlu0 %v964
    %v992 = vpop.xlane.xlu0 %991
    %993 = vadd.xlane.f32.xlu0 %v965
    %v994 = vpop.xlane.xlu0 %993
    %995 = vadd.xlane.f32.xlu0 %v966
    %v996 = vpop.xlane.xlu0 %995
    %997 = vadd.xlane.f32.xlu0 %v967
    %v998 = vpop.xlane.xlu0 %997
    %999 = vadd.xlane.f32.xlu0 %v968
    %v1000 = vpop.xlane.xlu0 %999
    %v1001 = vadd.f32 %v522, %v699
    %v1002 = vadd.f32 %v524, %v701
    %v1003 = vadd.f32 %v526, %v703
    %v1004 = vadd.f32 %v528, %v705
    %v1005 = vadd.f32 %v530, %v707
    %v1006 = vadd.f32 %v532, %v709
    %v1007 = vadd.f32 %v534, %v711
    %v1008 = vadd.f32 %v536, %v713
    %v1009 = vadd.f32 %v538, %v715
    %v1010 = vadd.f32 %v540, %v717
    %v1011 = vadd.f32 %v542, %v719
    %v1012 = vadd.f32 %v544, %v721
    %v1013 = vadd.f32 %v546, %v723
    %v1014 = vadd.f32 %v548, %v725
    %v1015 = vadd.f32 %v550, %v727
    %v1016 = vadd.f32 %v552, %v729
    %v1017 = vsub.f32 %v1001, 1.0
    %v1018 = vsub.f32 %v1002, 1.0
    %v1019 = vsub.f32 %v1003, 1.0
    %v1020 = vsub.f32 %v1004, 1.0
    %v1021 = vsub.f32 %v1005, 1.0
    %v1022 = vsub.f32 %v1006, 1.0
    %v1023 = vsub.f32 %v1007, 1.0
    %v1024 = vsub.f32 %v1008, 1.0
    %v1025 = vsub.f32 %v1009, 1.0
    %v1026 = vsub.f32 %v1010, 1.0
    %v1027 = vsub.f32 %v1011, 1.0
    %v1028 = vsub.f32 %v1012, 1.0
    %v1029 = vsub.f32 %v1013, 1.0
    %v1030 = vsub.f32 %v1014, 1.0
    %v1031 = vsub.f32 %v1015, 1.0
    %v1032 = vsub.f32 %v1016, 1.0
    %v1033 = vsub.f32 %v1017, 33.56315
    %v1034 = vsub.f32 %v1018, 33.56315
    %v1035 = vsub.f32 %v1019, 33.56315
    %v1036 = vsub.f32 %v1020, 33.56315
    %v1037 = vsub.f32 %v1021, 33.56315
    %v1038 = vsub.f32 %v1022, 33.56315
    %v1039 = vsub.f32 %v1023, 33.56315
    %v1040 = vsub.f32 %v1024, 33.56315
    %v1041 = vsub.f32 %v1025, 33.56315
    %v1042 = vsub.f32 %v1026, 33.56315
    %v1043 = vsub.f32 %v1027, 33.56315
    %v1044 = vsub.f32 %v1028, 33.56315
    %v1045 = vsub.f32 %v1029, 33.56315
    %v1046 = vsub.f32 %v1030, 33.56315
    %v1047 = vsub.f32 %v1031, 33.56315
    %v1048 = vsub.f32 %v1032, 33.56315
    %v1049 = vlaneseq
    %v1050 = vshrl.u32 %v1049, 7
    %v1051 = vadd.s32 %v1050, 8
    %v1052 = vadd.s32 %v1050, 16
    %v1053 = vadd.s32 %v1050, 24
    %v1054 = vadd.s32 %v1050, 32
    %v1055 = vadd.s32 %v1050, 40
    %v1056 = vadd.s32 %v1050, 48
    %v1057 = vadd.s32 %v1050, 56
    %v1058 = vadd.s32 %v1050, 64
    %v1059 = vadd.s32 %v1050, 72
    %v1060 = vadd.s32 %v1050, 80
    %v1061 = vadd.s32 %v1050, 88
    %v1062 = vadd.s32 %v1050, 96
    %v1063 = vadd.s32 %v1050, 104
    %v1064 = vadd.s32 %v1050, 112
    %v1065 = vadd.s32 %v1050, 120
    %v1066 = vstv %s337
    %v1067 = vadd.s32 %v1066, %v1050
    %v1068 = vadd.s32 %v1066, %v1051
    %v1069 = vadd.s32 %v1066, %v1052
    %v1070 = vadd.s32 %v1066, %v1053
    %v1071 = vadd.s32 %v1066, %v1054
    %v1072 = vadd.s32 %v1066, %v1055
    %v1073 = vadd.s32 %v1066, %v1056
    %v1074 = vadd.s32 %v1066, %v1057
    %v1075 = vadd.s32 %v1066, %v1058
    %v1076 = vadd.s32 %v1066, %v1059
    %v1077 = vadd.s32 %v1066, %v1060
    %v1078 = vadd.s32 %v1066, %v1061
    %v1079 = vadd.s32 %v1066, %v1062
    %v1080 = vadd.s32 %v1066, %v1063
    %v1081 = vadd.s32 %v1066, %v1064
    %v1082 = vadd.s32 %v1066, %v1065
    %vm1083 = vcmp.lt.s32.totalorder %v1067, 4
    %vm1084 = vcmp.lt.s32.totalorder %v1068, 4
    %vm1085 = vcmp.lt.s32.totalorder %v1069, 4
    %vm1086 = vcmp.lt.s32.totalorder %v1070, 4
    %vm1087 = vcmp.lt.s32.totalorder %v1071, 4
    %vm1088 = vcmp.lt.s32.totalorder %v1072, 4
    %vm1089 = vcmp.lt.s32.totalorder %v1073, 4
    %vm1090 = vcmp.lt.s32.totalorder %v1074, 4
    %vm1091 = vcmp.lt.s32.totalorder %v1075, 4
    %vm1092 = vcmp.lt.s32.totalorder %v1076, 4
    %vm1093 = vcmp.lt.s32.totalorder %v1077, 4
    %vm1094 = vcmp.lt.s32.totalorder %v1078, 4
    %vm1095 = vcmp.lt.s32.totalorder %v1079, 4
    %vm1096 = vcmp.lt.s32.totalorder %v1080, 4
    %vm1097 = vcmp.lt.s32.totalorder %v1081, 4
    %vm1098 = vcmp.lt.s32.totalorder %v1082, 4
    %v1099 = vsel %vm1083, %v1033, 1.0
    %v1100 = vsel %vm1084, %v1034, 1.0
    %v1101 = vsel %vm1085, %v1035, 1.0
    %v1102 = vsel %vm1086, %v1036, 1.0
    %v1103 = vsel %vm1087, %v1037, 1.0
    %v1104 = vsel %vm1088, %v1038, 1.0
    %v1105 = vsel %vm1089, %v1039, 1.0
    %v1106 = vsel %vm1090, %v1040, 1.0
    %v1107 = vsel %vm1091, %v1041, 1.0
    %v1108 = vsel %vm1092, %v1042, 1.0
    %v1109 = vsel %vm1093, %v1043, 1.0
    %v1110 = vsel %vm1094, %v1044, 1.0
    %v1111 = vsel %vm1095, %v1045, 1.0
    %v1112 = vsel %vm1096, %v1046, 1.0
    %v1113 = vsel %vm1097, %v1047, 1.0
    %v1114 = vsel %vm1098, %v1048, 1.0
    %v1115 = vsel %vm1083, %v970, 0.0
    %v1116 = vsel %vm1084, %v972, 0.0
    %v1117 = vsel %vm1085, %v974, 0.0
    %v1118 = vsel %vm1086, %v976, 0.0
    %v1119 = vsel %vm1087, %v978, 0.0
    %v1120 = vsel %vm1088, %v980, 0.0
    %v1121 = vsel %vm1089, %v982, 0.0
    %v1122 = vsel %vm1090, %v984, 0.0
    %v1123 = vsel %vm1091, %v986, 0.0
    %v1124 = vsel %vm1092, %v988, 0.0
    %v1125 = vsel %vm1093, %v990, 0.0
    %v1126 = vsel %vm1094, %v992, 0.0
    %v1127 = vsel %vm1095, %v994, 0.0
    %v1128 = vsel %vm1096, %v996, 0.0
    %v1129 = vsel %vm1097, %v998, 0.0
    %v1130 = vsel %vm1098, %v1000, 0.0
    %v1131 = vld [vmem:[#allocation5] sm:$0x1]
    %v1132 = vlog2.pop %v1099
    %v1133 = vmul.f32 %v1132, 0.6931472
    %v1134 = vlog2.pop %v1100
    %v1135 = vmul.f32 %v1134, 0.6931472
    %v1136 = vlog2.pop %v1101
    %v1137 = vmul.f32 %v1136, 0.6931472
    %v1138 = vlog2.pop %v1102
    %v1139 = vmul.f32 %v1138, 0.6931472
    %v1140 = vlog2.pop %v1103
    %v1141 = vmul.f32 %v1140, 0.6931472
    %v1142 = vlog2.pop %v1104
    %v1143 = vmul.f32 %v1142, 0.6931472
    %v1144 = vlog2.pop %v1105
    %v1145 = vmul.f32 %v1144, 0.6931472
    %v1146 = vlog2.pop %v1106
    %v1147 = vmul.f32 %v1146, 0.6931472
    %v1148 = vlog2.pop %v1107
    %v1149 = vmul.f32 %v1148, 0.6931472
    %v1150 = vlog2.pop %v1108
    %v1151 = vmul.f32 %v1150, 0.6931472
    %v1152 = vlog2.pop %v1109
    %v1153 = vmul.f32 %v1152, 0.6931472
    %v1154 = vlog2.pop %v1110
    %v1155 = vmul.f32 %v1154, 0.6931472
    %v1156 = vlog2.pop %v1111
    %v1157 = vmul.f32 %v1156, 0.6931472
    %v1158 = vlog2.pop %v1112
    %v1159 = vmul.f32 %v1158, 0.6931472
    %v1160 = vlog2.pop %v1113
    %v1161 = vmul.f32 %v1160, 0.6931472
    %v1162 = vlog2.pop %v1114
    %v1163 = vmul.f32 %v1162, 0.6931472
    %v1164 = vmul.f32 %v1115, 2.0
    %v1165 = vmul.f32 %v1116, 2.0
    %v1166 = vmul.f32 %v1117, 2.0
    %v1167 = vmul.f32 %v1118, 2.0
    %v1168 = vmul.f32 %v1119, 2.0
    %v1169 = vmul.f32 %v1120, 2.0
    %v1170 = vmul.f32 %v1121, 2.0
    %v1171 = vmul.f32 %v1122, 2.0
    %v1172 = vmul.f32 %v1123, 2.0
    %v1173 = vmul.f32 %v1124, 2.0
    %v1174 = vmul.f32 %v1125, 2.0
    %v1175 = vmul.f32 %v1126, 2.0
    %v1176 = vmul.f32 %v1127, 2.0
    %v1177 = vmul.f32 %v1128, 2.0
    %v1178 = vmul.f32 %v1129, 2.0
    %v1179 = vmul.f32 %v1130, 2.0
    %v1180 = vsub.f32 %v1133, %v1164
    %v1181 = vsub.f32 %v1135, %v1165
    %v1182 = vsub.f32 %v1137, %v1166
    %v1183 = vsub.f32 %v1139, %v1167
    %v1184 = vsub.f32 %v1141, %v1168
    %v1185 = vsub.f32 %v1143, %v1169
    %v1186 = vsub.f32 %v1145, %v1170
    %v1187 = vsub.f32 %v1147, %v1171
    %v1188 = vsub.f32 %v1149, %v1172
    %v1189 = vsub.f32 %v1151, %v1173
    %v1190 = vsub.f32 %v1153, %v1174
    %v1191 = vsub.f32 %v1155, %v1175
    %v1192 = vsub.f32 %v1157, %v1176
    %v1193 = vsub.f32 %v1159, %v1177
    %v1194 = vsub.f32 %v1161, %v1178
    %v1195 = vsub.f32 %v1163, %v1179
    %vm1196 = vcmask 7168
    %v1197 = vsel %vm1196, %v1180, 0.0
    %v1198 = vsel %vm1196, %v1181, 0.0
    %v1199 = vadd.f32 %v1197, %v1198
    %v1200 = vsel %vm1196, %v1182, 0.0
    %v1201 = vadd.f32 %v1199, %v1200
    %v1202 = vsel %vm1196, %v1183, 0.0
    %v1203 = vadd.f32 %v1201, %v1202
    %v1204 = vsel %vm1196, %v1184, 0.0
    %v1205 = vadd.f32 %v1203, %v1204
    %v1206 = vsel %vm1196, %v1185, 0.0
    %v1207 = vadd.f32 %v1205, %v1206
    %v1208 = vsel %vm1196, %v1186, 0.0
    %v1209 = vadd.f32 %v1207, %v1208
    %v1210 = vsel %vm1196, %v1187, 0.0
    %v1211 = vadd.f32 %v1209, %v1210
    %v1212 = vsel %vm1196, %v1188, 0.0
    %v1213 = vadd.f32 %v1211, %v1212
    %v1214 = vsel %vm1196, %v1189, 0.0
    %v1215 = vadd.f32 %v1213, %v1214
    %v1216 = vsel %vm1196, %v1190, 0.0
    %v1217 = vadd.f32 %v1215, %v1216
    %v1218 = vsel %vm1196, %v1191, 0.0
    %v1219 = vadd.f32 %v1217, %v1218
    %v1220 = vsel %vm1196, %v1192, 0.0
    %v1221 = vadd.f32 %v1219, %v1220
    %v1222 = vsel %vm1196, %v1193, 0.0
    %v1223 = vadd.f32 %v1221, %v1222
    %v1224 = vsel %vm1196, %v1194, 0.0
    %v1225 = vadd.f32 %v1223, %v1224
    %v1226 = vsel %vm1196, %v1195, 0.0
    %v1227 = vadd.f32 %v1225, %v1226
    %1228 = vadd.xlane.f32.xlu0 %v1227
    %v1229 = vpop.xlane.xlu0 %1228
    %v1230 = vrot.slane %v1229, 4
    %v1231 = vadd.f32 %v1229, %v1230
    %v1232 = vrot.slane %v1231, 2
    %v1233 = vadd.f32 %v1231, %v1232
    %v1234 = vrot.slane %v1233, 1
    %v1235 = vadd.f32 %v1233, %v1234
    %s1236 = vtos %v1235
    %v1237 = vstv %s1236
    %v1238 = vadd.f32 %v1131, %v1237
    %vm1239 = vcmask 0
    %1240 = vst.msk [vmem:[#allocation5] sm:$0x1] %vm1239, %v1238
    // Predicated region
    $region22: #{tpu_custom_call.1} parent=1 // pred_check
      %p1241 = pneg %p41
    $region23: #{tpu_custom_call.1} parent=1 // pred_check_branch
      %1243 = sbr.rel (%p1241) target = $region25
    $region24: #{tpu_custom_call.1} parent=1 // pred_region
      %v1244 = vld [vmem:[#allocation4] sm:$0x1]
      %v1245 = vsub.f32 %v1244, 1.0
      %v1246 = vsub.f32 %v1245, 33.56315
      %v1247 = vlaneseq
      %v1248 = vand.u32 %v1247, 127
      %vm1249 = vcmp.lt.s32.totalorder %v1248, 4
      %v1250 = vsel %vm1249, %v1246, 1.0
      %v1251 = vld [vmem:[#allocation5] sm:$0x1]
      %v1252 = vlog2.pop %v1250
      %v1253 = vmul.f32 %v1252, 0.6931472
      %vm1254 = vcmask 1040384
      %v1255 = vsel %vm1254, %v1253, 0.0
      %1256 = vadd.xlane.f32.xlu0 %v1255
      %v1257 = vpop.xlane.xlu0 %1256
      %v1258 = vrot.slane %v1257, 4
      %v1259 = vadd.f32 %v1257, %v1258
      %v1260 = vrot.slane %v1259, 2
      %v1261 = vadd.f32 %v1259, %v1260
      %v1262 = vrot.slane %v1261, 1
      %v1263 = vadd.f32 %v1261, %v1262
      %s1264 = vtos %v1263
      %v1265 = vstv %s1264
      %v1266 = vadd.f32 %v1251, %v1265
      %v1267 = vrcp.pop 8.0
      %v1268 = vmul.f32 %v1266, %v1267
      %v1269 = vadd.f32 %v1268, 2.0
      %1270 = vst.msk [vmem:[#allocation11] sm:$0x1] %vm1239, %v1269
    $region25: #{tpu_custom_call.1} parent=1 // pred_fallthru
      _
    // Predicated region
    $region26: #{tpu_custom_call.1} parent=1 // pred_check
      _
    $region27: #{tpu_custom_call.1} parent=1 // pred_check_branch
      %1272 = sbr.rel (0) target = $region29
    $region28: #{tpu_custom_call.1} parent=1 // pred_region
      %s1274 = ssub.s32 16, 16
      %1275 = vsyncadd [#allocation8], %s1274
      %s1277 = sshll.u32 [#allocation11], 4
      %s1278 = int_to_ptr.vmem [resolvable:$true] %s1277
      %1280 = dma.vmem_to_hbm [thread:$0]  %s1278, 16, %s2, [#allocation8]
    $region29: #{tpu_custom_call.1} parent=1 // pred_fallthru
      _
    // Predicated region
    $region30: #{tpu_custom_call.1} parent=1 // pred_check
      _
    $region31: #{tpu_custom_call.1} parent=1 // pred_check_branch
      %1282 = sbr.rel (0) target = $region33
    $region32: #{tpu_custom_call.1} parent=1 // pred_region
      %1283 = dma.done [#allocation8], 16
    $region33: #{tpu_custom_call.1} parent=1 // pred_fallthru
      _
    %1284 = vsyncpa [#allocation7], 1
    %1285 = vsyncpa [#allocation10], 1
    %1286 = vsyncpa [#allocation8], 1

</llo_original>
